<compile_context>
chip_gen: v7x
topology: tpu7x:2x2x1
jax: 0.10.0
libtpu: 0.0.40
codegen_flags: <defaults>
</compile_context>

<pallas_src>
import functools

import numpy as np
import jax
import jax.numpy as jnp
from jax.experimental import pallas as pl
from jax.experimental.pallas import tpu as pltpu

BN_EPS = 1e-5
_INV_SQRT2 = 0.7071067811865476


def _gelu(x):
    # exact GELU (erf form) — matches torch.nn.GELU() default
    return 0.5 * x * (1.0 + jax.lax.erf(x * _INV_SQRT2))


# ----------------------------------------------------------------------------
# Pallas kernel: one (bb, T, C) batch block per grid step, flattened to (bb*T, C).
# ----------------------------------------------------------------------------
def _make_kernel(t_len, has_res_proj):
    def kernel(*refs):
        if has_res_proj:
            (x_ref, w1_ref, b1_ref, s1_ref, sh1_ref,
             w2_ref, b2_ref, s2_ref, sh2_ref,
             wr_ref, br_ref, out_ref) = refs
        else:
            (x_ref, w1_ref, b1_ref, s1_ref, sh1_ref,
             w2_ref, b2_ref, s2_ref, sh2_ref, out_ref) = refs

        f32 = jnp.float32
        bf16 = jnp.bfloat16
        bb, t, c_in = x_ref.shape
        m = bb * t
        c_out = out_ref.shape[-1]

        x = x_ref[...].reshape(m, c_in)  # (bb*T, C_in) f32, time flattened over the batch block

        def shifted_cat(v):
            # v: (M, C) f32.  Build [v[t-1], v[t], v[t+1]] concatenated along lanes with zero
            # padding at each per-example time boundary (rows where t % T == 0 / T-1).
            rows, cols = v.shape
            t_idx = jax.lax.broadcasted_iota(jnp.int32, (rows, cols), 0) % t_len
            zero = jnp.zeros((), v.dtype)
            v_m1 = jnp.where(t_idx == 0, zero, pltpu.roll(v, 1, axis=0))
            v_p1 = jnp.where(t_idx == t_len - 1, zero, pltpu.roll(v, rows - 1, axis=0))
            return jnp.concatenate([v_m1, v, v_p1], axis=-1)  # (M, 3C)

        def conv_bn(v, w_ref, b_ref, s_ref, sh_ref):
            # fused 3-tap conv: single K = 3*C matmul on bf16 operands, f32 accumulation
            xc = shifted_cat(v).astype(bf16)
            y = jnp.dot(xc, w_ref[...], preferred_element_type=f32) + b_ref[...]
            return y * s_ref[...] + sh_ref[...]  # folded BatchNorm1d (eval running stats)

        if has_res_proj:
            residual = (jnp.dot(x.astype(bf16), wr_ref[...], preferred_element_type=f32)
                        + br_ref[...])
        else:
            residual = x  # nn.Identity

        h = _gelu(conv_bn(x, w1_ref, b1_ref, s1_ref, sh1_ref))
        # TODO(synk): Dropout omitted — inference semantics (identity).
        h = conv_bn(h, w2_ref, b2_ref, s2_ref, sh2_ref)
        h = _gelu(h + residual)

        out_ref[...] = h.reshape(bb, t, c_out).astype(out_ref.dtype)

    return kernel


# ----------------------------------------------------------------------------
# Wrapper: accepts PyTorch NCT layout (B, C_in, T), returns (B, C_out, T).
# ----------------------------------------------------------------------------
@functools.partial(jax.jit, static_argnames=("bb",))
def temporal_conv_block(x_nct, params, *, bb=8):
    B, c_in, T = x_nct.shape
    c_out = params["bn1_scale"].shape[-1]
    has_res_proj = "w_res" in params

    # time on sublanes, channels on lanes (lane-dense output tiles)
    x = jnp.transpose(x_nct, (0, 2, 1)).astype(jnp.float32)  # (B, T, C_in)

    bb = max(1, min(int(bb), B))
    b_pad = -(-B // bb) * bb
    if b_pad != B:
        x = jnp.pad(x, ((0, b_pad - B), (0, 0), (0, 0)))

    bf16, f32 = jnp.bfloat16, jnp.float32
    inputs = [
        x,
        params["w1"].astype(bf16), params["b1"].astype(f32),
        params["bn1_scale"].astype(f32), params["bn1_shift"].astype(f32),
        params["w2"].astype(bf16), params["b2"].astype(f32),
        params["bn2_scale"].astype(f32), params["bn2_shift"].astype(f32),
    ]
    if has_res_proj:
        inputs += [params["w_res"].astype(bf16), params["b_res"].astype(f32)]

    def param_spec(a):
        nd = a.ndim
        return pl.BlockSpec(tuple(a.shape), lambda i, _nd=nd: (0,) * _nd)

    in_specs = [pl.BlockSpec((bb, T, c_in), lambda i: (i, 0, 0))]
    in_specs += [param_spec(a) for a in inputs[1:]]

    out = pl.pallas_call(
        _make_kernel(T, has_res_proj),
        out_shape=jax.ShapeDtypeStruct((b_pad, T, c_out), jnp.float32),
        grid_spec=pltpu.PrefetchScalarGridSpec(
            num_scalar_prefetch=0,
            grid=(b_pad // bb,),
            in_specs=in_specs,
            out_specs=pl.BlockSpec((bb, T, c_out), lambda i: (i, 0, 0)),
        ),
        compiler_params=pltpu.CompilerParams(dimension_semantics=("parallel",)),
    )(*inputs)

    out = out[:B]
    return jnp.transpose(out, (0, 2, 1))  # back to (B, C_out, T)


# ----------------------------------------------------------------------------
# Deterministic parameter construction (shapes / init per TemporalConvBlock.__init__)
# ----------------------------------------------------------------------------
def init_params(key, in_channels, out_channels, k=3):
    ks = jax.random.split(key, 6)

    def conv_weights(kk, c_in, c_out, ksz):
        bound = 1.0 / np.sqrt(c_in * ksz)
        kw, kb = jax.random.split(kk)
        w_t = jax.random.uniform(kw, (c_out, c_in, ksz), jnp.float32, -bound, bound)  # torch layout
        b = jax.random.uniform(kb, (1, c_out), jnp.float32, -bound, bound)
        # (C_out, C_in, K) -> (K, C_in, C_out) -> (K*C_in, C_out): a single matmul against
        # [x[t-1], x[t], x[t+1]] concatenated along lanes implements the k=3 conv.
        w = jnp.transpose(w_t, (2, 1, 0)).reshape(ksz * c_in, c_out)
        return w, b

    def bn_fold(kk, c):
        k1, k2, k3_, k4 = jax.random.split(kk, 4)
        gamma = 1.0 + 0.1 * jax.random.normal(k1, (1, c), jnp.float32)
        beta = 0.1 * jax.random.normal(k2, (1, c), jnp.float32)
        rmean = 0.1 * jax.random.normal(k3_, (1, c), jnp.float32)
        rvar = 1.0 + 0.1 * jax.random.uniform(k4, (1, c), jnp.float32)
        scale = gamma / jnp.sqrt(rvar + BN_EPS)
        shift = beta - rmean * scale
        return scale, shift

    w1, b1 = conv_weights(ks[0], in_channels, out_channels, k)
    w2, b2 = conv_weights(ks[1], out_channels, out_channels, k)
    bn1_scale, bn1_shift = bn_fold(ks[2], out_channels)
    bn2_scale, bn2_shift = bn_fold(ks[3], out_channels)

    p = dict(w1=w1, b1=b1, bn1_scale=bn1_scale, bn1_shift=bn1_shift,
             w2=w2, b2=b2, bn2_scale=bn2_scale, bn2_shift=bn2_shift)
    if in_channels != out_channels:
        wr, br = conv_weights(ks[4], in_channels, out_channels, 1)  # 1x1 residual conv
        p["w_res"], p["b_res"] = wr, br
    return p


# ----------------------------------------------------------------------------
# Pure-JAX f32 reference (same math, same folded-BN eval semantics)
# ----------------------------------------------------------------------------
def reference(x_nct, p):
    x = jnp.transpose(x_nct, (0, 2, 1))  # (B, T, C_in)

    def conv(v, w_fused, b):
        c = v.shape[-1]
        w = w_fused.reshape(3, c, -1)
        vp = jnp.pad(v, ((0, 0), (1, 1), (0, 0)))
        return vp[:, :-2] @ w[0] + vp[:, 1:-1] @ w[1] + vp[:, 2:] @ w[2] + b

    residual = (x @ p["w_res"] + p["b_res"]) if "w_res" in p else x
    h = _gelu(conv(x, p["w1"], p["b1"]) * p["bn1_scale"] + p["bn1_shift"])
    h = conv(h, p["w2"], p["b2"]) * p["bn2_scale"] + p["bn2_shift"]
    h = _gelu(h + residual)
    return jnp.transpose(h, (0, 2, 1))


if __name__ == "__main__":
    B, T, bb = 16, 24, 8  # bb*T = 192 rows per MXU pass, grid of 2 parallel steps

    key = jax.random.PRNGKey(0)
    kx1, kp1, kx2, kp2 = jax.random.split(key, 4)

    # Config A: in_channels == out_channels  -> residual is nn.Identity
    c = 128
    x_a = jax.random.normal(kx1, (B, c, T), jnp.float32)
    params_a = init_params(kp1, c, c)
    out_a = jax.block_until_ready(temporal_conv_block(x_a, params_a, bb=bb))
    assert out_a.shape == (B, c, T), out_a.shape

    # Config B: in_channels != out_channels -> residual is a 1x1 Conv1d
    c_in, c_out = 128, 256
    x_b = jax.random.normal(kx2, (B, c_in, T), jnp.float32)
    params_b = init_params(kp2, c_in, c_out)
    out_b = jax.block_until_ready(temporal_conv_block(x_b, params_b, bb=bb))
    assert out_b.shape == (B, c_out, T), out_b.shape

    # bf16 MXU operands (f32 accumulation) vs. an all-f32 reference -> ~1% tolerance.
    for name, out, x, p in (("identity-residual", out_a, x_a, params_a),
                            ("conv-residual", out_b, x_b, params_b)):
        ref = reference(x, p)
        o, r = np.asarray(out), np.asarray(ref)
        if not np.allclose(o, r, atol=5e-2, rtol=5e-2):
            err = np.max(np.abs(o - r))
            raise AssertionError(f"{name}: Pallas kernel does not match reference "
                                 f"(max abs err {err:.3e})")

    print("KERNEL_OK")
</pallas_src>

<mosaic_0001>
module attributes {stable_mosaic.version = 11 : i64} {
  func.func @kernel(%arg0: i32, %arg1: memref<8x24x128xf32, #tpu.memory_space<vmem>>, %arg2: memref<384x128xbf16, #tpu.memory_space<vmem>>, %arg3: memref<1x128xf32, #tpu.memory_space<vmem>>, %arg4: memref<1x128xf32, #tpu.memory_space<vmem>>, %arg5: memref<1x128xf32, #tpu.memory_space<vmem>>, %arg6: memref<384x128xbf16, #tpu.memory_space<vmem>>, %arg7: memref<1x128xf32, #tpu.memory_space<vmem>>, %arg8: memref<1x128xf32, #tpu.memory_space<vmem>>, %arg9: memref<1x128xf32, #tpu.memory_space<vmem>>, %arg10: memref<8x24x128xf32, #tpu.memory_space<vmem>>) attributes {dimension_semantics = [#tpu.dimension_semantics<parallel>], iteration_bounds = array<i64: 2>, scalar_prefetch = 0 : i64, scratch_operands = 0 : i64, tpu.core_type = #tpu.core_type<tc>, window_params = [{transform_indices = @transform_0, window_bounds = array<i64: 8, 24, 128>}, {pipeline_mode = #tpu.pipeline_mode<synchronous>, transform_indices = @transform_1, window_bounds = array<i64: 384, 128>}, {pipeline_mode = #tpu.pipeline_mode<synchronous>, transform_indices = @transform_2, window_bounds = array<i64: 1, 128>}, {pipeline_mode = #tpu.pipeline_mode<synchronous>, transform_indices = @transform_3, window_bounds = array<i64: 1, 128>}, {pipeline_mode = #tpu.pipeline_mode<synchronous>, transform_indices = @transform_4, window_bounds = array<i64: 1, 128>}, {pipeline_mode = #tpu.pipeline_mode<synchronous>, transform_indices = @transform_5, window_bounds = array<i64: 384, 128>}, {pipeline_mode = #tpu.pipeline_mode<synchronous>, transform_indices = @transform_6, window_bounds = array<i64: 1, 128>}, {pipeline_mode = #tpu.pipeline_mode<synchronous>, transform_indices = @transform_7, window_bounds = array<i64: 1, 128>}, {pipeline_mode = #tpu.pipeline_mode<synchronous>, transform_indices = @transform_8, window_bounds = array<i64: 1, 128>}, {transform_indices = @transform_9, window_bounds = array<i64: 8, 24, 128>}]} {
    %c0 = arith.constant 0 : index
    %c0_0 = arith.constant 0 : index
    %c0_1 = arith.constant 0 : index
    %0 = vector.load %arg1[%c0, %c0_0, %c0_1] : memref<8x24x128xf32, #tpu.memory_space<vmem>>, vector<8x24x128xf32>
    %1 = vector.shape_cast %0 : vector<8x24x128xf32> to vector<192x128xf32>
    %2 = tpu.iota {dimensions = array<i32: 0>} : vector<192x128xi32>
    %c24_i32 = arith.constant 24 : i32
    %c0_i32 = arith.constant 0 : i32
    %3 = arith.cmpi eq, %c24_i32, %c0_i32 : i32
    %c1_i32 = arith.constant 1 : i32
    %4 = arith.select %3, %c1_i32, %c24_i32 : i32
    %5 = vector.broadcast %4 : i32 to vector<192x128xi32>
    %6 = arith.remsi %2, %5 : vector<192x128xi32>
    %c0_i32_2 = arith.constant 0 : i32
    %7 = vector.broadcast %c0_i32_2 : i32 to vector<192x128xi32>
    %8 = arith.cmpi ne, %6, %7 : vector<192x128xi32>
    %c0_i32_3 = arith.constant 0 : i32
    %9 = vector.broadcast %c0_i32_3 : i32 to vector<192x128xi32>
    %10 = arith.cmpi slt, %6, %9 : vector<192x128xi32>
    %c0_i32_4 = arith.constant 0 : i32
    %11 = arith.cmpi slt, %4, %c0_i32_4 : i32
    %12 = vector.broadcast %11 : i1 to vector<192x128xi1>
    %13 = vector.broadcast %12 : vector<192x128xi1> to vector<192x128xi1>
    %14 = arith.xori %10, %13 : vector<192x128xi1>
    %15 = arith.andi %14, %8 : vector<192x128xi1>
    %16 = vector.broadcast %4 : i32 to vector<192x128xi32>
    %17 = arith.addi %6, %16 : vector<192x128xi32>
    %18 = arith.select %15, %17, %6 : vector<192x128xi1>, vector<192x128xi32>
    %c0_i32_5 = arith.constant 0 : i32
    %19 = vector.broadcast %c0_i32_5 : i32 to vector<192x128xi32>
    %20 = arith.cmpi eq, %18, %19 : vector<192x128xi32>
    %c1_i32_6 = arith.constant 1 : i32
    %21 = tpu.dynamic_rotate %1 by %c1_i32_6 dim 0 : vector<192x128xf32>, i32 -> vector<192x128xf32>
    %cst = arith.constant 0.000000e+00 : f32
    %22 = vector.broadcast %cst : f32 to vector<192x128xf32>
    %23 = arith.select %20, %22, %21 : vector<192x128xi1>, vector<192x128xf32>
    %c23_i32 = arith.constant 23 : i32
    %24 = vector.broadcast %c23_i32 : i32 to vector<192x128xi32>
    %25 = arith.cmpi eq, %18, %24 : vector<192x128xi32>
    %c191_i32 = arith.constant 191 : i32
    %26 = tpu.dynamic_rotate %1 by %c191_i32 dim 0 : vector<192x128xf32>, i32 -> vector<192x128xf32>
    %cst_7 = arith.constant 0.000000e+00 : f32
    %27 = vector.broadcast %cst_7 : f32 to vector<192x128xf32>
    %28 = arith.select %25, %27, %26 : vector<192x128xi1>, vector<192x128xf32>
    %29 = tpu.concatenate %23, %1, %28 in 1 : vector<192x128xf32>, vector<192x128xf32>, vector<192x128xf32> -> vector<192x384xf32>
    %30 = arith.truncf %29 : vector<192x384xf32> to vector<192x384xbf16>
    %c0_8 = arith.constant 0 : index
    %c0_9 = arith.constant 0 : index
    %31 = vector.load %arg2[%c0_8, %c0_9] : memref<384x128xbf16, #tpu.memory_space<vmem>>, vector<384x128xbf16>
    %cst_10 = arith.constant dense<0.000000e+00> : vector<192x128xf32>
    %32 = tpu.matmul %30, %31, %cst_10 {dimension_numbers = #tpu.dot_dimension_numbers<[1], [0], [0], [1], [0, 0, 1, 1], [], []>} : vector<192x384xbf16>, vector<384x128xbf16>, vector<192x128xf32> -> vector<192x128xf32>
    %c0_11 = arith.constant 0 : index
    %c0_12 = arith.constant 0 : index
    %33 = vector.load %arg3[%c0_11, %c0_12] : memref<1x128xf32, #tpu.memory_space<vmem>>, vector<1x128xf32>
    %34 = vector.broadcast %33 : vector<1x128xf32> to vector<192x128xf32>
    %35 = arith.addf %32, %34 : vector<192x128xf32>
    %c0_13 = arith.constant 0 : index
    %c0_14 = arith.constant 0 : index
    %36 = vector.load %arg4[%c0_13, %c0_14] : memref<1x128xf32, #tpu.memory_space<vmem>>, vector<1x128xf32>
    %37 = vector.broadcast %36 : vector<1x128xf32> to vector<192x128xf32>
    %38 = arith.mulf %35, %37 : vector<192x128xf32>
    %c0_15 = arith.constant 0 : index
    %c0_16 = arith.constant 0 : index
    %39 = vector.load %arg5[%c0_15, %c0_16] : memref<1x128xf32, #tpu.memory_space<vmem>>, vector<1x128xf32>
    %40 = vector.broadcast %39 : vector<1x128xf32> to vector<192x128xf32>
    %41 = arith.addf %38, %40 : vector<192x128xf32>
    %cst_17 = arith.constant 5.000000e-01 : f32
    %42 = vector.broadcast %cst_17 : f32 to vector<192x128xf32>
    %43 = arith.mulf %42, %41 : vector<192x128xf32>
    %cst_18 = arith.constant 0.707106769 : f32
    %44 = vector.broadcast %cst_18 : f32 to vector<192x128xf32>
    %45 = arith.mulf %41, %44 : vector<192x128xf32>
    %46 = math.erf %45 : vector<192x128xf32>
    %cst_19 = arith.constant 1.000000e+00 : f32
    %47 = vector.broadcast %cst_19 : f32 to vector<192x128xf32>
    %48 = arith.addf %47, %46 : vector<192x128xf32>
    %49 = arith.mulf %43, %48 : vector<192x128xf32>
    %50 = tpu.iota {dimensions = array<i32: 0>} : vector<192x128xi32>
    %c24_i32_20 = arith.constant 24 : i32
    %c0_i32_21 = arith.constant 0 : i32
    %51 = arith.cmpi eq, %c24_i32_20, %c0_i32_21 : i32
    %c1_i32_22 = arith.constant 1 : i32
    %52 = arith.select %51, %c1_i32_22, %c24_i32_20 : i32
    %53 = vector.broadcast %52 : i32 to vector<192x128xi32>
    %54 = arith.remsi %50, %53 : vector<192x128xi32>
    %c0_i32_23 = arith.constant 0 : i32
    %55 = vector.broadcast %c0_i32_23 : i32 to vector<192x128xi32>
    %56 = arith.cmpi ne, %54, %55 : vector<192x128xi32>
    %c0_i32_24 = arith.constant 0 : i32
    %57 = vector.broadcast %c0_i32_24 : i32 to vector<192x128xi32>
    %58 = arith.cmpi slt, %54, %57 : vector<192x128xi32>
    %c0_i32_25 = arith.constant 0 : i32
    %59 = arith.cmpi slt, %52, %c0_i32_25 : i32
    %60 = vector.broadcast %59 : i1 to vector<192x128xi1>
    %61 = vector.broadcast %60 : vector<192x128xi1> to vector<192x128xi1>
    %62 = arith.xori %58, %61 : vector<192x128xi1>
    %63 = arith.andi %62, %56 : vector<192x128xi1>
    %64 = vector.broadcast %52 : i32 to vector<192x128xi32>
    %65 = arith.addi %54, %64 : vector<192x128xi32>
    %66 = arith.select %63, %65, %54 : vector<192x128xi1>, vector<192x128xi32>
    %c0_i32_26 = arith.constant 0 : i32
    %67 = vector.broadcast %c0_i32_26 : i32 to vector<192x128xi32>
    %68 = arith.cmpi eq, %66, %67 : vector<192x128xi32>
    %c1_i32_27 = arith.constant 1 : i32
    %69 = tpu.dynamic_rotate %49 by %c1_i32_27 dim 0 : vector<192x128xf32>, i32 -> vector<192x128xf32>
    %cst_28 = arith.constant 0.000000e+00 : f32
    %70 = vector.broadcast %cst_28 : f32 to vector<192x128xf32>
    %71 = arith.select %68, %70, %69 : vector<192x128xi1>, vector<192x128xf32>
    %c23_i32_29 = arith.constant 23 : i32
    %72 = vector.broadcast %c23_i32_29 : i32 to vector<192x128xi32>
    %73 = arith.cmpi eq, %66, %72 : vector<192x128xi32>
    %c191_i32_30 = arith.constant 191 : i32
    %74 = tpu.dynamic_rotate %49 by %c191_i32_30 dim 0 : vector<192x128xf32>, i32 -> vector<192x128xf32>
    %cst_31 = arith.constant 0.000000e+00 : f32
    %75 = vector.broadcast %cst_31 : f32 to vector<192x128xf32>
    %76 = arith.select %73, %75, %74 : vector<192x128xi1>, vector<192x128xf32>
    %77 = tpu.concatenate %71, %49, %76 in 1 : vector<192x128xf32>, vector<192x128xf32>, vector<192x128xf32> -> vector<192x384xf32>
    %78 = arith.truncf %77 : vector<192x384xf32> to vector<192x384xbf16>
    %c0_32 = arith.constant 0 : index
    %c0_33 = arith.constant 0 : index
    %79 = vector.load %arg6[%c0_32, %c0_33] : memref<384x128xbf16, #tpu.memory_space<vmem>>, vector<384x128xbf16>
    %cst_34 = arith.constant dense<0.000000e+00> : vector<192x128xf32>
    %80 = tpu.matmul %78, %79, %cst_34 {dimension_numbers = #tpu.dot_dimension_numbers<[1], [0], [0], [1], [0, 0, 1, 1], [], []>} : vector<192x384xbf16>, vector<384x128xbf16>, vector<192x128xf32> -> vector<192x128xf32>
    %c0_35 = arith.constant 0 : index
    %c0_36 = arith.constant 0 : index
    %81 = vector.load %arg7[%c0_35, %c0_36] : memref<1x128xf32, #tpu.memory_space<vmem>>, vector<1x128xf32>
    %82 = vector.broadcast %81 : vector<1x128xf32> to vector<192x128xf32>
    %83 = arith.addf %80, %82 : vector<192x128xf32>
    %c0_37 = arith.constant 0 : index
    %c0_38 = arith.constant 0 : index
    %84 = vector.load %arg8[%c0_37, %c0_38] : memref<1x128xf32, #tpu.memory_space<vmem>>, vector<1x128xf32>
    %85 = vector.broadcast %84 : vector<1x128xf32> to vector<192x128xf32>
    %86 = arith.mulf %83, %85 : vector<192x128xf32>
    %c0_39 = arith.constant 0 : index
    %c0_40 = arith.constant 0 : index
    %87 = vector.load %arg9[%c0_39, %c0_40] : memref<1x128xf32, #tpu.memory_space<vmem>>, vector<1x128xf32>
    %88 = vector.broadcast %87 : vector<1x128xf32> to vector<192x128xf32>
    %89 = arith.addf %86, %88 : vector<192x128xf32>
    %90 = arith.addf %89, %1 : vector<192x128xf32>
    %cst_41 = arith.constant 5.000000e-01 : f32
    %91 = vector.broadcast %cst_41 : f32 to vector<192x128xf32>
    %92 = arith.mulf %91, %90 : vector<192x128xf32>
    %cst_42 = arith.constant 0.707106769 : f32
    %93 = vector.broadcast %cst_42 : f32 to vector<192x128xf32>
    %94 = arith.mulf %90, %93 : vector<192x128xf32>
    %95 = math.erf %94 : vector<192x128xf32>
    %cst_43 = arith.constant 1.000000e+00 : f32
    %96 = vector.broadcast %cst_43 : f32 to vector<192x128xf32>
    %97 = arith.addf %96, %95 : vector<192x128xf32>
    %98 = arith.mulf %92, %97 : vector<192x128xf32>
    %99 = vector.shape_cast %98 : vector<192x128xf32> to vector<8x24x128xf32>
    %c0_44 = arith.constant 0 : index
    %c0_45 = arith.constant 0 : index
    %c0_46 = arith.constant 0 : index
    %100 = vector.load %arg10[%c0_44, %c0_45, %c0_46] : memref<8x24x128xf32, #tpu.memory_space<vmem>>, vector<8x24x128xf32>
    tpu.vector_store %arg10[%c0_44, %c0_45, %c0_46], %99 {strides = array<i32>} : memref<8x24x128xf32, #tpu.memory_space<vmem>>, vector<8x24x128xf32>,
    return
  }
  func.func @transform_0(%arg0: i32) -> (i32, i32, i32) {
    %c0_i32 = arith.constant 0 : i32
    %c0_i32_0 = arith.constant 0 : i32
    %c0_i32_1 = arith.constant 0 : i32
    return %arg0, %c0_i32, %c0_i32_0 : i32, i32, i32
  }
  func.func @transform_1(%arg0: i32) -> (i32, i32) {
    %c0_i32 = arith.constant 0 : i32
    %c0_i32_0 = arith.constant 0 : i32
    %c0_i32_1 = arith.constant 0 : i32
    return %c0_i32, %c0_i32_0 : i32, i32
  }
  func.func @transform_2(%arg0: i32) -> (i32, i32) {
    %c0_i32 = arith.constant 0 : i32
    %c0_i32_0 = arith.constant 0 : i32
    %c0_i32_1 = arith.constant 0 : i32
    return %c0_i32, %c0_i32_0 : i32, i32
  }
  func.func @transform_3(%arg0: i32) -> (i32, i32) {
    %c0_i32 = arith.constant 0 : i32
    %c0_i32_0 = arith.constant 0 : i32
    %c0_i32_1 = arith.constant 0 : i32
    return %c0_i32, %c0_i32_0 : i32, i32
  }
  func.func @transform_4(%arg0: i32) -> (i32, i32) {
    %c0_i32 = arith.constant 0 : i32
    %c0_i32_0 = arith.constant 0 : i32
    %c0_i32_1 = arith.constant 0 : i32
    return %c0_i32, %c0_i32_0 : i32, i32
  }
  func.func @transform_5(%arg0: i32) -> (i32, i32) {
    %c0_i32 = arith.constant 0 : i32
    %c0_i32_0 = arith.constant 0 : i32
    %c0_i32_1 = arith.constant 0 : i32
    return %c0_i32, %c0_i32_0 : i32, i32
  }
  func.func @transform_6(%arg0: i32) -> (i32, i32) {
    %c0_i32 = arith.constant 0 : i32
    %c0_i32_0 = arith.constant 0 : i32
    %c0_i32_1 = arith.constant 0 : i32
    return %c0_i32, %c0_i32_0 : i32, i32
  }
  func.func @transform_7(%arg0: i32) -> (i32, i32) {
    %c0_i32 = arith.constant 0 : i32
    %c0_i32_0 = arith.constant 0 : i32
    %c0_i32_1 = arith.constant 0 : i32
    return %c0_i32, %c0_i32_0 : i32, i32
  }
  func.func @transform_8(%arg0: i32) -> (i32, i32) {
    %c0_i32 = arith.constant 0 : i32
    %c0_i32_0 = arith.constant 0 : i32
    %c0_i32_1 = arith.constant 0 : i32
    return %c0_i32, %c0_i32_0 : i32, i32
  }
  func.func @transform_9(%arg0: i32) -> (i32, i32, i32) {
    %c0_i32 = arith.constant 0 : i32
    %c0_i32_0 = arith.constant 0 : i32
    %c0_i32_1 = arith.constant 0 : i32
    return %arg0, %c0_i32, %c0_i32_0 : i32, i32, i32
  }
}

</mosaic_0001>

<llo_original>
// kernel: temporal_conv_block.1
$region0: #{temporal_conv_block.1}
  #allocation0 [shape = 'u32[]', space=smem, size = 0x4, offset = 0x4, fixed_abs, tag = 'smem constant byte address 0x4 - core index']
  #allocation1 [shape = 'u32[144,128]{1,0:T(1,128)}', space=vmem, size = 0x12000, scoped, tag = 'internal scratch']
  %s0 = inlined_call_operand.vmem [shape: f32[16,24,128], index: 0, kind: input, shape index: {}]
  %s1 = inlined_call_operand.vmem [shape: bf16[384,128], index: 1, kind: input, shape index: {}]
  %s2 = inlined_call_operand.vmem [shape: f32[1,128], index: 2, kind: input, shape index: {}]
  %s3 = inlined_call_operand.vmem [shape: f32[1,128], index: 3, kind: input, shape index: {}]
  %s4 = inlined_call_operand.vmem [shape: f32[1,128], index: 4, kind: input, shape index: {}]
  %s5 = inlined_call_operand.vmem [shape: bf16[384,128], index: 5, kind: input, shape index: {}]
  %s6 = inlined_call_operand.vmem [shape: f32[1,128], index: 6, kind: input, shape index: {}]
  %s7 = inlined_call_operand.vmem [shape: f32[1,128], index: 7, kind: input, shape index: {}]
  %s8 = inlined_call_operand.vmem [shape: f32[1,128], index: 8, kind: input, shape index: {}]
  %s9 = inlined_call_operand.hbm [shape: f32[16,24,128], index: 9, kind: output, shape index: {}]
  %s10 = sld [smem:[#allocation0]]
  $region69: #{temporal_conv_block.1} parent=0
    _
  %s12 = ssub.s32 1, %s10
  %s13 = scalar_select 0, %s12, %s10
  $region1: #{temporal_conv_block.1} parent=0
    #allocation2 [shape = 'u8[196608]{0}', space=vmem, size = 0x30000, scoped, tag = 'output window, operand 0']
    #allocation3 [shape = 's32[2]{0}', space=sflag, size = 0x8, scoped, tag = 'scoped memory for temporal_conv_block.1']
    %14 = vsyncpa [#allocation3], 0
    %s15 = scalar_lea.sflag [#allocation3], 1
    %16 = vsyncpa %s15, 0
    loop: start=0, step=1, limit=4
    $region2: #{temporal_conv_block.1} parent=1 // loop_pre_header
      _
    $region3: #{temporal_conv_block.1} parent=1 // loop_header
      %s18 = sphi 0, %s22
      %p19 = scmp.ge.s32.totalorder %s18, 4
      %s28 = sphi 0, %s30
      %s31 = sphi 0, %s28
      %s32 = sphi 0, %s31
      %s48 = sphi 0, %s32
      %s52 = sphi 0, %s52
      %s54 = sphi 0, %s52
      %s55 = sphi 0, %s54
      %s69 = sphi 0, %s55
      %s73 = sphi 0, %s73
      %s75 = sphi 0, %s73
      %s76 = sphi 0, %s75
      %s90 = sphi 0, %s76
      %s94 = sphi 0, %s94
      %s96 = sphi 0, %s94
      %s97 = sphi 0, %s96
      %s111 = sphi 0, %s97
      %s115 = sphi 0, %s115
      %s117 = sphi 0, %s115
      %s118 = sphi 0, %s117
      %s132 = sphi 0, %s118
      %s136 = sphi 0, %s136
      %s138 = sphi 0, %s136
      %s139 = sphi 0, %s138
      %s153 = sphi 0, %s139
      %s157 = sphi 0, %s157
      %s159 = sphi 0, %s157
      %s160 = sphi 0, %s159
      %s174 = sphi 0, %s160
      %s178 = sphi 0, %s178
      %s180 = sphi 0, %s178
      %s181 = sphi 0, %s180
      %s195 = sphi 0, %s181
      %s199 = sphi 0, %s199
      %s201 = sphi 0, %s199
      %s202 = sphi 0, %s201
      %s216 = sphi 0, %s202
      %s222 = sphi 0, %s224
      %s225 = sphi 0, %s222
      %s226 = sphi 0, %s225
      %s242 = sphi 0, %s226
    $region4: #{temporal_conv_block.1} parent=1 // loop_header_branch
      %21 = sbr.rel (%p19) target = $region8
    $region5: #{temporal_conv_block.1} parent=1 // loop_body
      %s23 = ssub.s32 %s18, 1
      %s24 = ssub.s32 %s18, 2
      %s25 = sadd.s32 %s18, 1
      %s26 = ssub.s32 %s18, %s25
      %p27 = scmp.eq.s32.totalorder %s26, 0
      %s29 = sadd.s32 %s28, 1
      %s30 = scalar_select %p27, %s28, %s29
      %p33 = pneg %p27
      %p34 = scmp.eq.s32.totalorder %s18, 1
      %p35 = por %p33, %p34
      %p36 = scmp.ne.s32.totalorder %s28, %s31
      %p37 = scmp.eq.s32.totalorder %s18, 0
      %p38 = por %p36, %p37
      %p39 = scmp.ne.s32.totalorder %s28, %s31
      %p40 = scmp.eq.s32.totalorder %s23, 1
      %p41 = por %p39, %p40
      %p42 = scmp.ne.s32.totalorder %s31, %s32
      %p43 = scmp.eq.s32.totalorder %s23, 0
      %p44 = por %p42, %p43
      %p45 = scmp.ne.s32.totalorder %s31, %s32
      %p46 = scmp.eq.s32.totalorder %s24, 1
      %p47 = por %p45, %p46
      %p49 = scmp.ne.s32.totalorder %s32, %s48
      %p50 = scmp.eq.s32.totalorder %s24, 0
      %p51 = por %p49, %p50
      %s53 = sadd.s32 %s52, 1
      %p56 = scmp.eq.s32.totalorder %s18, 1
      %p57 = scmp.ne.s32.totalorder %s52, %s54
      %p58 = scmp.eq.s32.totalorder %s18, 0
      %p59 = por %p57, %p58
      %p60 = scmp.ne.s32.totalorder %s52, %s54
      %p61 = scmp.eq.s32.totalorder %s23, 1
      %p62 = por %p60, %p61
      %p63 = scmp.ne.s32.totalorder %s54, %s55
      %p64 = scmp.eq.s32.totalorder %s23, 0
      %p65 = por %p63, %p64
      %p66 = scmp.ne.s32.totalorder %s54, %s55
      %p67 = scmp.eq.s32.totalorder %s24, 1
      %p68 = por %p66, %p67
      %p70 = scmp.ne.s32.totalorder %s55, %s69
      %p71 = scmp.eq.s32.totalorder %s24, 0
      %p72 = por %p70, %p71
      %s74 = sadd.s32 %s73, 1
      %p77 = scmp.eq.s32.totalorder %s18, 1
      %p78 = scmp.ne.s32.totalorder %s73, %s75
      %p79 = scmp.eq.s32.totalorder %s18, 0
      %p80 = por %p78, %p79
      %p81 = scmp.ne.s32.totalorder %s73, %s75
      %p82 = scmp.eq.s32.totalorder %s23, 1
      %p83 = por %p81, %p82
      %p84 = scmp.ne.s32.totalorder %s75, %s76
      %p85 = scmp.eq.s32.totalorder %s23, 0
      %p86 = por %p84, %p85
      %p87 = scmp.ne.s32.totalorder %s75, %s76
      %p88 = scmp.eq.s32.totalorder %s24, 1
      %p89 = por %p87, %p88
      %p91 = scmp.ne.s32.totalorder %s76, %s90
      %p92 = scmp.eq.s32.totalorder %s24, 0
      %p93 = por %p91, %p92
      %s95 = sadd.s32 %s94, 1
      %p98 = scmp.eq.s32.totalorder %s18, 1
      %p99 = scmp.ne.s32.totalorder %s94, %s96
      %p100 = scmp.eq.s32.totalorder %s18, 0
      %p101 = por %p99, %p100
      %p102 = scmp.ne.s32.totalorder %s94, %s96
      %p103 = scmp.eq.s32.totalorder %s23, 1
      %p104 = por %p102, %p103
      %p105 = scmp.ne.s32.totalorder %s96, %s97
      %p106 = scmp.eq.s32.totalorder %s23, 0
      %p107 = por %p105, %p106
      %p108 = scmp.ne.s32.totalorder %s96, %s97
      %p109 = scmp.eq.s32.totalorder %s24, 1
      %p110 = por %p108, %p109
      %p112 = scmp.ne.s32.totalorder %s97, %s111
      %p113 = scmp.eq.s32.totalorder %s24, 0
      %p114 = por %p112, %p113
      %s116 = sadd.s32 %s115, 1
      %p119 = scmp.eq.s32.totalorder %s18, 1
      %p120 = scmp.ne.s32.totalorder %s115, %s117
      %p121 = scmp.eq.s32.totalorder %s18, 0
      %p122 = por %p120, %p121
      %p123 = scmp.ne.s32.totalorder %s115, %s117
      %p124 = scmp.eq.s32.totalorder %s23, 1
      %p125 = por %p123, %p124
      %p126 = scmp.ne.s32.totalorder %s117, %s118
      %p127 = scmp.eq.s32.totalorder %s23, 0
      %p128 = por %p126, %p127
      %p129 = scmp.ne.s32.totalorder %s117, %s118
      %p130 = scmp.eq.s32.totalorder %s24, 1
      %p131 = por %p129, %p130
      %p133 = scmp.ne.s32.totalorder %s118, %s132
      %p134 = scmp.eq.s32.totalorder %s24, 0
      %p135 = por %p133, %p134
      %s137 = sadd.s32 %s136, 1
      %p140 = scmp.eq.s32.totalorder %s18, 1
      %p141 = scmp.ne.s32.totalorder %s136, %s138
      %p142 = scmp.eq.s32.totalorder %s18, 0
      %p143 = por %p141, %p142
      %p144 = scmp.ne.s32.totalorder %s136, %s138
      %p145 = scmp.eq.s32.totalorder %s23, 1
      %p146 = por %p144, %p145
      %p147 = scmp.ne.s32.totalorder %s138, %s139
      %p148 = scmp.eq.s32.totalorder %s23, 0
      %p149 = por %p147, %p148
      %p150 = scmp.ne.s32.totalorder %s138, %s139
      %p151 = scmp.eq.s32.totalorder %s24, 1
      %p152 = por %p150, %p151
      %p154 = scmp.ne.s32.totalorder %s139, %s153
      %p155 = scmp.eq.s32.totalorder %s24, 0
      %p156 = por %p154, %p155
      %s158 = sadd.s32 %s157, 1
      %p161 = scmp.eq.s32.totalorder %s18, 1
      %p162 = scmp.ne.s32.totalorder %s157, %s159
      %p163 = scmp.eq.s32.totalorder %s18, 0
      %p164 = por %p162, %p163
      %p165 = scmp.ne.s32.totalorder %s157, %s159
      %p166 = scmp.eq.s32.totalorder %s23, 1
      %p167 = por %p165, %p166
      %p168 = scmp.ne.s32.totalorder %s159, %s160
      %p169 = scmp.eq.s32.totalorder %s23, 0
      %p170 = por %p168, %p169
      %p171 = scmp.ne.s32.totalorder %s159, %s160
      %p172 = scmp.eq.s32.totalorder %s24, 1
      %p173 = por %p171, %p172
      %p175 = scmp.ne.s32.totalorder %s160, %s174
      %p176 = scmp.eq.s32.totalorder %s24, 0
      %p177 = por %p175, %p176
      %s179 = sadd.s32 %s178, 1
      %p182 = scmp.eq.s32.totalorder %s18, 1
      %p183 = scmp.ne.s32.totalorder %s178, %s180
      %p184 = scmp.eq.s32.totalorder %s18, 0
      %p185 = por %p183, %p184
      %p186 = scmp.ne.s32.totalorder %s178, %s180
      %p187 = scmp.eq.s32.totalorder %s23, 1
      %p188 = por %p186, %p187
      %p189 = scmp.ne.s32.totalorder %s180, %s181
      %p190 = scmp.eq.s32.totalorder %s23, 0
      %p191 = por %p189, %p190
      %p192 = scmp.ne.s32.totalorder %s180, %s181
      %p193 = scmp.eq.s32.totalorder %s24, 1
      %p194 = por %p192, %p193
      %p196 = scmp.ne.s32.totalorder %s181, %s195
      %p197 = scmp.eq.s32.totalorder %s24, 0
      %p198 = por %p196, %p197
      %s200 = sadd.s32 %s199, 1
      %p203 = scmp.eq.s32.totalorder %s18, 1
      %p204 = scmp.ne.s32.totalorder %s199, %s201
      %p205 = scmp.eq.s32.totalorder %s18, 0
      %p206 = por %p204, %p205
      %p207 = scmp.ne.s32.totalorder %s199, %s201
      %p208 = scmp.eq.s32.totalorder %s23, 1
      %p209 = por %p207, %p208
      %p210 = scmp.ne.s32.totalorder %s201, %s202
      %p211 = scmp.eq.s32.totalorder %s23, 0
      %p212 = por %p210, %p211
      %p213 = scmp.ne.s32.totalorder %s201, %s202
      %p214 = scmp.eq.s32.totalorder %s24, 1
      %p215 = por %p213, %p214
      %p217 = scmp.ne.s32.totalorder %s202, %s216
      %p218 = scmp.eq.s32.totalorder %s24, 0
      %p219 = por %p217, %p218
      %s220 = ssub.s32 %s18, %s25
      %p221 = scmp.eq.s32.totalorder %s220, 0
      %s223 = sadd.s32 %s222, 1
      %s224 = scalar_select %p221, %s222, %s223
      %p227 = pneg %p221
      %p228 = scmp.eq.s32.totalorder %s18, 1
      %p229 = por %p227, %p228
      %p230 = scmp.ne.s32.totalorder %s222, %s225
      %p231 = scmp.eq.s32.totalorder %s18, 0
      %p232 = por %p230, %p231
      %p233 = scmp.ne.s32.totalorder %s222, %s225
      %p234 = scmp.eq.s32.totalorder %s23, 1
      %p235 = por %p233, %p234
      %p236 = scmp.ne.s32.totalorder %s225, %s226
      %p237 = scmp.eq.s32.totalorder %s23, 0
      %p238 = por %p236, %p237
      %p239 = scmp.ne.s32.totalorder %s225, %s226
      %p240 = scmp.eq.s32.totalorder %s24, 1
      %p241 = por %p239, %p240
      %p243 = scmp.ne.s32.totalorder %s226, %s242
      %p244 = scmp.eq.s32.totalorder %s24, 0
      %p245 = por %p243, %p244
      %p246 = scmp.le.s32.totalorder 1, %s18
      %p247 = scmp.lt.s32.totalorder %s18, 3
      %p248 = pnand %p246, %p247
      %p249 = pneg %p248
      // Predicated region
      $region9: #{temporal_conv_block.1} parent=5 // pred_check
        _
      $region10: #{temporal_conv_block.1} parent=5 // pred_check_branch
        %251 = sbr.rel (%p248) target = $region12
      $region11: #{temporal_conv_block.1} parent=5 // pred_region
        %s252 = ssub.s32 %s18, 1
        // Predicated region
        $region13: #{temporal_conv_block.1} parent=11 // pred_check
          %p253 = pneg %p65
        $region14: #{temporal_conv_block.1} parent=11 // pred_check_branch
          %255 = sbr.rel (%p253) target = $region16
        $region15: #{temporal_conv_block.1} parent=11 // pred_region
          _
        $region16: #{temporal_conv_block.1} parent=11 // pred_fallthru
          _
        // Predicated region
        $region17: #{temporal_conv_block.1} parent=11 // pred_check
          %p256 = pneg %p86
        $region18: #{temporal_conv_block.1} parent=11 // pred_check_branch
          %258 = sbr.rel (%p256) target = $region20
        $region19: #{temporal_conv_block.1} parent=11 // pred_region
          _
        $region20: #{temporal_conv_block.1} parent=11 // pred_fallthru
          _
        // Predicated region
        $region21: #{temporal_conv_block.1} parent=11 // pred_check
          %p259 = pneg %p107
        $region22: #{temporal_conv_block.1} parent=11 // pred_check_branch
          %261 = sbr.rel (%p259) target = $region24
        $region23: #{temporal_conv_block.1} parent=11 // pred_region
          _
        $region24: #{temporal_conv_block.1} parent=11 // pred_fallthru
          _
        // Predicated region
        $region25: #{temporal_conv_block.1} parent=11 // pred_check
          %p262 = pneg %p128
        $region26: #{temporal_conv_block.1} parent=11 // pred_check_branch
          %264 = sbr.rel (%p262) target = $region28
        $region27: #{temporal_conv_block.1} parent=11 // pred_region
          _
        $region28: #{temporal_conv_block.1} parent=11 // pred_fallthru
          _
        // Predicated region
        $region29: #{temporal_conv_block.1} parent=11 // pred_check
          %p265 = pneg %p149
        $region30: #{temporal_conv_block.1} parent=11 // pred_check_branch
          %267 = sbr.rel (%p265) target = $region32
        $region31: #{temporal_conv_block.1} parent=11 // pred_region
          _
        $region32: #{temporal_conv_block.1} parent=11 // pred_fallthru
          _
        // Predicated region
        $region33: #{temporal_conv_block.1} parent=11 // pred_check
          %p268 = pneg %p170
        $region34: #{temporal_conv_block.1} parent=11 // pred_check_branch
          %270 = sbr.rel (%p268) target = $region36
        $region35: #{temporal_conv_block.1} parent=11 // pred_region
          _
        $region36: #{temporal_conv_block.1} parent=11 // pred_fallthru
          _
        // Predicated region
        $region37: #{temporal_conv_block.1} parent=11 // pred_check
          %p271 = pneg %p191
        $region38: #{temporal_conv_block.1} parent=11 // pred_check_branch
          %273 = sbr.rel (%p271) target = $region40
        $region39: #{temporal_conv_block.1} parent=11 // pred_region
          _
        $region40: #{temporal_conv_block.1} parent=11 // pred_fallthru
          _
        // Predicated region
        $region41: #{temporal_conv_block.1} parent=11 // pred_check
          %p274 = pneg %p212
        $region42: #{temporal_conv_block.1} parent=11 // pred_check_branch
          %276 = sbr.rel (%p274) target = $region44
        $region43: #{temporal_conv_block.1} parent=11 // pred_region
          _
        $region44: #{temporal_conv_block.1} parent=11 // pred_fallthru
          _
      $region12: #{temporal_conv_block.1} parent=5 // pred_fallthru
        _
      %p277 = scmp.lt.s32.totalorder %s18, 2
      // Predicated region
      $region45: #{temporal_conv_block.1} parent=5 // pred_check
        %p278 = pneg %p277
      $region46: #{temporal_conv_block.1} parent=5 // pred_check_branch
        %280 = sbr.rel (%p278) target = $region48
      $region47: #{temporal_conv_block.1} parent=5 // pred_region
        // Predicated region
        $region49: #{temporal_conv_block.1} parent=47 // pred_check
          %p281 = pneg %p38
        $region50: #{temporal_conv_block.1} parent=47 // pred_check_branch
          %283 = sbr.rel (%p281) target = $region52
        $region51: #{temporal_conv_block.1} parent=47 // pred_region
          %s284 = smul.u32 8, %s18
          %p285 = scmp.lt.s32.totalorder %s284, 15
          %s286 = scalar_select %p285, %s284, 15
          %s287 = smul.addr %s286, 3
          %s288 = smul.addr %s287, 8
          %s289 = scalar_lea.vmem %s0, %s288
          %s290 = smul.u32 8, %s18
        $region52: #{temporal_conv_block.1} parent=47 // pred_fallthru
          _
      $region48: #{temporal_conv_block.1} parent=5 // pred_fallthru
        _
      %p291 = scmp.le.s32.totalorder 1, %s18
      %p292 = scmp.lt.s32.totalorder %s18, 3
      %p293 = pnand %p291, %p292
      %p294 = pneg %p293
      // Predicated region
      $region53: #{temporal_conv_block.1} parent=5 // pred_check
        _
      $region54: #{temporal_conv_block.1} parent=5 // pred_check_branch
        %296 = sbr.rel (%p293) target = $region56
      $region55: #{temporal_conv_block.1} parent=5 // pred_region
        %s297 = ssub.s32 %s18, 1
        %s298 = smul.u32 8, %s23
        %p299 = scmp.lt.s32.totalorder %s298, 15
        %s300 = scalar_select %p299, %s298, 15
        %s301 = smul.addr %s300, 3
        %s302 = smul.addr %s301, 8
        %s303 = scalar_lea.vmem %s0, %s302
        %p304 = pneg %p44
        %p305 = pneg %p41
        %p306 = pneg %p65
        %p307 = pneg %p62
        %p308 = pneg %p86
        %p309 = pneg %p83
        %p310 = pneg %p107
        %p311 = pneg %p104
        %p312 = pneg %p128
        %p313 = pneg %p125
        %p314 = pneg %p149
        %p315 = pneg %p146
        %p316 = pneg %p170
        %p317 = pneg %p167
        %p318 = pneg %p191
        %p319 = pneg %p188
        %p320 = pneg %p212
        %p321 = pneg %p209
        %p322 = pneg %p238
        %p323 = pneg %p235
        %s324 = sand.u32 %s225, 1
        %s325 = scalar_lea.sflag [#allocation3], %s324
        %s326 = sand.u32 %s225, 1
        %s327 = smul.addr %s326, 192
        %s328 = scalar_lea.vmem [#allocation2], %s327
        %s329 = smul.u32 8, %s23
        %p330 = scmp.lt.s32.totalorder %s329, 15
        %s331 = scalar_select %p330, %s329, 15
        %s332 = smul.addr %s331, 3
        %s333 = smul.addr %s332, 8
        %s334 = scalar_lea.vmem %s0, %s333
        %s335 = smul.u32 8, %s23
        %s336 = smul.u32 8, %s23
        %v338 = vld [vmem:[%s334] sm:$0xff]
        %v339 = vld [vmem:[%s334 + $0x8] sm:$0xff]
        %v340 = vld [vmem:[%s334 + $0x10] sm:$0xff]
        %v341 = vld [vmem:[%s334 + $0x18] sm:$0xff]
        %v342 = vld [vmem:[%s334 + $0x20] sm:$0xff]
        %v343 = vld [vmem:[%s334 + $0x28] sm:$0xff]
        %v344 = vld [vmem:[%s334 + $0x30] sm:$0xff]
        %v345 = vld [vmem:[%s334 + $0x38] sm:$0xff]
        %v346 = vld [vmem:[%s334 + $0x40] sm:$0xff]
        %v347 = vld [vmem:[%s334 + $0x48] sm:$0xff]
        %v348 = vld [vmem:[%s334 + $0x50] sm:$0xff]
        %v349 = vld [vmem:[%s334 + $0x58] sm:$0xff]
        %v350 = vld [vmem:[%s334 + $0x60] sm:$0xff]
        %v351 = vld [vmem:[%s334 + $0x68] sm:$0xff]
        %v352 = vld [vmem:[%s334 + $0x70] sm:$0xff]
        %v353 = vld [vmem:[%s334 + $0x78] sm:$0xff]
        %v354 = vld [vmem:[%s334 + $0x80] sm:$0xff]
        %v355 = vld [vmem:[%s334 + $0x88] sm:$0xff]
        %v356 = vld [vmem:[%s334 + $0x90] sm:$0xff]
        %v357 = vld [vmem:[%s334 + $0x98] sm:$0xff]
        %v358 = vld [vmem:[%s334 + $0xa0] sm:$0xff]
        %v359 = vld [vmem:[%s334 + $0xa8] sm:$0xff]
        %v360 = vld [vmem:[%s334 + $0xb0] sm:$0xff]
        %v361 = vld [vmem:[%s334 + $0xb8] sm:$0xff]
        %v362 = vlaneseq
        %v363 = vshrl.u32 %v362, 7
        %v364 = vadd.s32 %v363, 8
        %v365 = vadd.s32 %v363, 16
        %v366 = vadd.s32 %v363, 24
        %v367 = vadd.s32 %v363, 32
        %v368 = vadd.s32 %v363, 40
        %v369 = vadd.s32 %v363, 48
        %v370 = vadd.s32 %v363, 56
        %v371 = vadd.s32 %v363, 64
        %v372 = vadd.s32 %v363, 72
        %v373 = vadd.s32 %v363, 80
        %v374 = vadd.s32 %v363, 88
        %v375 = vadd.s32 %v363, 96
        %v376 = vadd.s32 %v363, 104
        %v377 = vadd.s32 %v363, 112
        %v378 = vadd.s32 %v363, 120
        %v379 = vadd.s32 %v363, 128
        %v380 = vadd.s32 %v363, 136
        %v381 = vadd.s32 %v363, 144
        %v382 = vadd.s32 %v363, 152
        %v383 = vadd.s32 %v363, 160
        %v384 = vadd.s32 %v363, 168
        %v385 = vadd.s32 %v363, 176
        %v386 = vadd.s32 %v363, 184
        %vm387 = vcmp.lt.s32.totalorder %v363, 0
        %v388 = vsub.s32 0, %v363
        %v389 = vsel %vm387, %v388, %v363
        %v390 = vmul.u32.u64.compose %v389, 2863311531
        %v391 = vextract.low.u32 %v390
        %v392 = vextract.high.u32 %v390
        %v393 = vshrl.u32 %v392, 4
        %v394 = vmul.u32 %v393, 24
        %v395 = vsub.s32 %v389, %v394
        %v396 = vsub.s32 0, %v395
        %v397 = vsel %vm387, %v396, %v395
        %vm398 = vcmp.lt.s32.totalorder %v364, 0
        %v399 = vsub.s32 0, %v364
        %v400 = vsel %vm398, %v399, %v364
        %v401 = vmul.u32.u64.compose %v400, 2863311531
        %v402 = vextract.low.u32 %v401
        %v403 = vextract.high.u32 %v401
        %v404 = vshrl.u32 %v403, 4
        %v405 = vmul.u32 %v404, 24
        %v406 = vsub.s32 %v400, %v405
        %v407 = vsub.s32 0, %v406
        %v408 = vsel %vm398, %v407, %v406
        %vm409 = vcmp.lt.s32.totalorder %v365, 0
        %v410 = vsub.s32 0, %v365
        %v411 = vsel %vm409, %v410, %v365
        %v412 = vmul.u32.u64.compose %v411, 2863311531
        %v413 = vextract.low.u32 %v412
        %v414 = vextract.high.u32 %v412
        %v415 = vshrl.u32 %v414, 4
        %v416 = vmul.u32 %v415, 24
        %v417 = vsub.s32 %v411, %v416
        %v418 = vsub.s32 0, %v417
        %v419 = vsel %vm409, %v418, %v417
        %vm420 = vcmp.lt.s32.totalorder %v366, 0
        %v421 = vsub.s32 0, %v366
        %v422 = vsel %vm420, %v421, %v366
        %v423 = vmul.u32.u64.compose %v422, 2863311531
        %v424 = vextract.low.u32 %v423
        %v425 = vextract.high.u32 %v423
        %v426 = vshrl.u32 %v425, 4
        %v427 = vmul.u32 %v426, 24
        %v428 = vsub.s32 %v422, %v427
        %v429 = vsub.s32 0, %v428
        %v430 = vsel %vm420, %v429, %v428
        %vm431 = vcmp.lt.s32.totalorder %v367, 0
        %v432 = vsub.s32 0, %v367
        %v433 = vsel %vm431, %v432, %v367
        %v434 = vmul.u32.u64.compose %v433, 2863311531
        %v435 = vextract.low.u32 %v434
        %v436 = vextract.high.u32 %v434
        %v437 = vshrl.u32 %v436, 4
        %v438 = vmul.u32 %v437, 24
        %v439 = vsub.s32 %v433, %v438
        %v440 = vsub.s32 0, %v439
        %v441 = vsel %vm431, %v440, %v439
        %vm442 = vcmp.lt.s32.totalorder %v368, 0
        %v443 = vsub.s32 0, %v368
        %v444 = vsel %vm442, %v443, %v368
        %v445 = vmul.u32.u64.compose %v444, 2863311531
        %v446 = vextract.low.u32 %v445
        %v447 = vextract.high.u32 %v445
        %v448 = vshrl.u32 %v447, 4
        %v449 = vmul.u32 %v448, 24
        %v450 = vsub.s32 %v444, %v449
        %v451 = vsub.s32 0, %v450
        %v452 = vsel %vm442, %v451, %v450
        %vm453 = vcmp.lt.s32.totalorder %v369, 0
        %v454 = vsub.s32 0, %v369
        %v455 = vsel %vm453, %v454, %v369
        %v456 = vmul.u32.u64.compose %v455, 2863311531
        %v457 = vextract.low.u32 %v456
        %v458 = vextract.high.u32 %v456
        %v459 = vshrl.u32 %v458, 4
        %v460 = vmul.u32 %v459, 24
        %v461 = vsub.s32 %v455, %v460
        %v462 = vsub.s32 0, %v461
        %v463 = vsel %vm453, %v462, %v461
        %vm464 = vcmp.lt.s32.totalorder %v370, 0
        %v465 = vsub.s32 0, %v370
        %v466 = vsel %vm464, %v465, %v370
        %v467 = vmul.u32.u64.compose %v466, 2863311531
        %v468 = vextract.low.u32 %v467
        %v469 = vextract.high.u32 %v467
        %v470 = vshrl.u32 %v469, 4
        %v471 = vmul.u32 %v470, 24
        %v472 = vsub.s32 %v466, %v471
        %v473 = vsub.s32 0, %v472
        %v474 = vsel %vm464, %v473, %v472
        %vm475 = vcmp.lt.s32.totalorder %v371, 0
        %v476 = vsub.s32 0, %v371
        %v477 = vsel %vm475, %v476, %v371
        %v478 = vmul.u32.u64.compose %v477, 2863311531
        %v479 = vextract.low.u32 %v478
        %v480 = vextract.high.u32 %v478
        %v481 = vshrl.u32 %v480, 4
        %v482 = vmul.u32 %v481, 24
        %v483 = vsub.s32 %v477, %v482
        %v484 = vsub.s32 0, %v483
        %v485 = vsel %vm475, %v484, %v483
        %vm486 = vcmp.lt.s32.totalorder %v372, 0
        %v487 = vsub.s32 0, %v372
        %v488 = vsel %vm486, %v487, %v372
        %v489 = vmul.u32.u64.compose %v488, 2863311531
        %v490 = vextract.low.u32 %v489
        %v491 = vextract.high.u32 %v489
        %v492 = vshrl.u32 %v491, 4
        %v493 = vmul.u32 %v492, 24
        %v494 = vsub.s32 %v488, %v493
        %v495 = vsub.s32 0, %v494
        %v496 = vsel %vm486, %v495, %v494
        %vm497 = vcmp.lt.s32.totalorder %v373, 0
        %v498 = vsub.s32 0, %v373
        %v499 = vsel %vm497, %v498, %v373
        %v500 = vmul.u32.u64.compose %v499, 2863311531
        %v501 = vextract.low.u32 %v500
        %v502 = vextract.high.u32 %v500
        %v503 = vshrl.u32 %v502, 4
        %v504 = vmul.u32 %v503, 24
        %v505 = vsub.s32 %v499, %v504
        %v506 = vsub.s32 0, %v505
        %v507 = vsel %vm497, %v506, %v505
        %vm508 = vcmp.lt.s32.totalorder %v374, 0
        %v509 = vsub.s32 0, %v374
        %v510 = vsel %vm508, %v509, %v374
        %v511 = vmul.u32.u64.compose %v510, 2863311531
        %v512 = vextract.low.u32 %v511
        %v513 = vextract.high.u32 %v511
        %v514 = vshrl.u32 %v513, 4
        %v515 = vmul.u32 %v514, 24
        %v516 = vsub.s32 %v510, %v515
        %v517 = vsub.s32 0, %v516
        %v518 = vsel %vm508, %v517, %v516
        %vm519 = vcmp.lt.s32.totalorder %v375, 0
        %v520 = vsub.s32 0, %v375
        %v521 = vsel %vm519, %v520, %v375
        %v522 = vmul.u32.u64.compose %v521, 2863311531
        %v523 = vextract.low.u32 %v522
        %v524 = vextract.high.u32 %v522
        %v525 = vshrl.u32 %v524, 4
        %v526 = vmul.u32 %v525, 24
        %v527 = vsub.s32 %v521, %v526
        %v528 = vsub.s32 0, %v527
        %v529 = vsel %vm519, %v528, %v527
        %vm530 = vcmp.lt.s32.totalorder %v376, 0
        %v531 = vsub.s32 0, %v376
        %v532 = vsel %vm530, %v531, %v376
        %v533 = vmul.u32.u64.compose %v532, 2863311531
        %v534 = vextract.low.u32 %v533
        %v535 = vextract.high.u32 %v533
        %v536 = vshrl.u32 %v535, 4
        %v537 = vmul.u32 %v536, 24
        %v538 = vsub.s32 %v532, %v537
        %v539 = vsub.s32 0, %v538
        %v540 = vsel %vm530, %v539, %v538
        %vm541 = vcmp.lt.s32.totalorder %v377, 0
        %v542 = vsub.s32 0, %v377
        %v543 = vsel %vm541, %v542, %v377
        %v544 = vmul.u32.u64.compose %v543, 2863311531
        %v545 = vextract.low.u32 %v544
        %v546 = vextract.high.u32 %v544
        %v547 = vshrl.u32 %v546, 4
        %v548 = vmul.u32 %v547, 24
        %v549 = vsub.s32 %v543, %v548
        %v550 = vsub.s32 0, %v549
        %v551 = vsel %vm541, %v550, %v549
        %vm552 = vcmp.lt.s32.totalorder %v378, 0
        %v553 = vsub.s32 0, %v378
        %v554 = vsel %vm552, %v553, %v378
        %v555 = vmul.u32.u64.compose %v554, 2863311531
        %v556 = vextract.low.u32 %v555
        %v557 = vextract.high.u32 %v555
        %v558 = vshrl.u32 %v557, 4
        %v559 = vmul.u32 %v558, 24
        %v560 = vsub.s32 %v554, %v559
        %v561 = vsub.s32 0, %v560
        %v562 = vsel %vm552, %v561, %v560
        %vm563 = vcmp.lt.s32.totalorder %v379, 0
        %v564 = vsub.s32 0, %v379
        %v565 = vsel %vm563, %v564, %v379
        %v566 = vmul.u32.u64.compose %v565, 2863311531
        %v567 = vextract.low.u32 %v566
        %v568 = vextract.high.u32 %v566
        %v569 = vshrl.u32 %v568, 4
        %v570 = vmul.u32 %v569, 24
        %v571 = vsub.s32 %v565, %v570
        %v572 = vsub.s32 0, %v571
        %v573 = vsel %vm563, %v572, %v571
        %vm574 = vcmp.lt.s32.totalorder %v380, 0
        %v575 = vsub.s32 0, %v380
        %v576 = vsel %vm574, %v575, %v380
        %v577 = vmul.u32.u64.compose %v576, 2863311531
        %v578 = vextract.low.u32 %v577
        %v579 = vextract.high.u32 %v577
        %v580 = vshrl.u32 %v579, 4
        %v581 = vmul.u32 %v580, 24
        %v582 = vsub.s32 %v576, %v581
        %v583 = vsub.s32 0, %v582
        %v584 = vsel %vm574, %v583, %v582
        %vm585 = vcmp.lt.s32.totalorder %v381, 0
        %v586 = vsub.s32 0, %v381
        %v587 = vsel %vm585, %v586, %v381
        %v588 = vmul.u32.u64.compose %v587, 2863311531
        %v589 = vextract.low.u32 %v588
        %v590 = vextract.high.u32 %v588
        %v591 = vshrl.u32 %v590, 4
        %v592 = vmul.u32 %v591, 24
        %v593 = vsub.s32 %v587, %v592
        %v594 = vsub.s32 0, %v593
        %v595 = vsel %vm585, %v594, %v593
        %vm596 = vcmp.lt.s32.totalorder %v382, 0
        %v597 = vsub.s32 0, %v382
        %v598 = vsel %vm596, %v597, %v382
        %v599 = vmul.u32.u64.compose %v598, 2863311531
        %v600 = vextract.low.u32 %v599
        %v601 = vextract.high.u32 %v599
        %v602 = vshrl.u32 %v601, 4
        %v603 = vmul.u32 %v602, 24
        %v604 = vsub.s32 %v598, %v603
        %v605 = vsub.s32 0, %v604
        %v606 = vsel %vm596, %v605, %v604
        %vm607 = vcmp.lt.s32.totalorder %v383, 0
        %v608 = vsub.s32 0, %v383
        %v609 = vsel %vm607, %v608, %v383
        %v610 = vmul.u32.u64.compose %v609, 2863311531
        %v611 = vextract.low.u32 %v610
        %v612 = vextract.high.u32 %v610
        %v613 = vshrl.u32 %v612, 4
        %v614 = vmul.u32 %v613, 24
        %v615 = vsub.s32 %v609, %v614
        %v616 = vsub.s32 0, %v615
        %v617 = vsel %vm607, %v616, %v615
        %vm618 = vcmp.lt.s32.totalorder %v384, 0
        %v619 = vsub.s32 0, %v384
        %v620 = vsel %vm618, %v619, %v384
        %v621 = vmul.u32.u64.compose %v620, 2863311531
        %v622 = vextract.low.u32 %v621
        %v623 = vextract.high.u32 %v621
        %v624 = vshrl.u32 %v623, 4
        %v625 = vmul.u32 %v624, 24
        %v626 = vsub.s32 %v620, %v625
        %v627 = vsub.s32 0, %v626
        %v628 = vsel %vm618, %v627, %v626
        %vm629 = vcmp.lt.s32.totalorder %v385, 0
        %v630 = vsub.s32 0, %v385
        %v631 = vsel %vm629, %v630, %v385
        %v632 = vmul.u32.u64.compose %v631, 2863311531
        %v633 = vextract.low.u32 %v632
        %v634 = vextract.high.u32 %v632
        %v635 = vshrl.u32 %v634, 4
        %v636 = vmul.u32 %v635, 24
        %v637 = vsub.s32 %v631, %v636
        %v638 = vsub.s32 0, %v637
        %v639 = vsel %vm629, %v638, %v637
        %vm640 = vcmp.lt.s32.totalorder %v386, 0
        %v641 = vsub.s32 0, %v386
        %v642 = vsel %vm640, %v641, %v386
        %v643 = vmul.u32.u64.compose %v642, 2863311531
        %v644 = vextract.low.u32 %v643
        %v645 = vextract.high.u32 %v643
        %v646 = vshrl.u32 %v645, 4
        %v647 = vmul.u32 %v646, 24
        %v648 = vsub.s32 %v642, %v647
        %v649 = vsub.s32 0, %v648
        %v650 = vsel %vm640, %v649, %v648
        %vm651 = vcmp.ne.s32.totalorder %v397, 0
        %vm652 = vcmp.ne.s32.totalorder %v408, 0
        %vm653 = vcmp.ne.s32.totalorder %v419, 0
        %vm654 = vcmp.ne.s32.totalorder %v430, 0
        %vm655 = vcmp.ne.s32.totalorder %v441, 0
        %vm656 = vcmp.ne.s32.totalorder %v452, 0
        %vm657 = vcmp.ne.s32.totalorder %v463, 0
        %vm658 = vcmp.ne.s32.totalorder %v474, 0
        %vm659 = vcmp.ne.s32.totalorder %v485, 0
        %vm660 = vcmp.ne.s32.totalorder %v496, 0
        %vm661 = vcmp.ne.s32.totalorder %v507, 0
        %vm662 = vcmp.ne.s32.totalorder %v518, 0
        %vm663 = vcmp.ne.s32.totalorder %v529, 0
        %vm664 = vcmp.ne.s32.totalorder %v540, 0
        %vm665 = vcmp.ne.s32.totalorder %v551, 0
        %vm666 = vcmp.ne.s32.totalorder %v562, 0
        %vm667 = vcmp.ne.s32.totalorder %v573, 0
        %vm668 = vcmp.ne.s32.totalorder %v584, 0
        %vm669 = vcmp.ne.s32.totalorder %v595, 0
        %vm670 = vcmp.ne.s32.totalorder %v606, 0
        %vm671 = vcmp.ne.s32.totalorder %v617, 0
        %vm672 = vcmp.ne.s32.totalorder %v628, 0
        %vm673 = vcmp.ne.s32.totalorder %v639, 0
        %vm674 = vcmp.ne.s32.totalorder %v650, 0
        %vm675 = vcmp.lt.s32.totalorder %v397, 0
        %vm676 = vcmp.lt.s32.totalorder %v408, 0
        %vm677 = vcmp.lt.s32.totalorder %v419, 0
        %vm678 = vcmp.lt.s32.totalorder %v430, 0
        %vm679 = vcmp.lt.s32.totalorder %v441, 0
        %vm680 = vcmp.lt.s32.totalorder %v452, 0
        %vm681 = vcmp.lt.s32.totalorder %v463, 0
        %vm682 = vcmp.lt.s32.totalorder %v474, 0
        %vm683 = vcmp.lt.s32.totalorder %v485, 0
        %vm684 = vcmp.lt.s32.totalorder %v496, 0
        %vm685 = vcmp.lt.s32.totalorder %v507, 0
        %vm686 = vcmp.lt.s32.totalorder %v518, 0
        %vm687 = vcmp.lt.s32.totalorder %v529, 0
        %vm688 = vcmp.lt.s32.totalorder %v540, 0
        %vm689 = vcmp.lt.s32.totalorder %v551, 0
        %vm690 = vcmp.lt.s32.totalorder %v562, 0
        %vm691 = vcmp.lt.s32.totalorder %v573, 0
        %vm692 = vcmp.lt.s32.totalorder %v584, 0
        %vm693 = vcmp.lt.s32.totalorder %v595, 0
        %vm694 = vcmp.lt.s32.totalorder %v606, 0
        %vm695 = vcmp.lt.s32.totalorder %v617, 0
        %vm696 = vcmp.lt.s32.totalorder %v628, 0
        %vm697 = vcmp.lt.s32.totalorder %v639, 0
        %vm698 = vcmp.lt.s32.totalorder %v650, 0
        %vm699 = vmand %vm675, %vm651
        %vm700 = vmand %vm676, %vm652
        %vm701 = vmand %vm677, %vm653
        %vm702 = vmand %vm678, %vm654
        %vm703 = vmand %vm679, %vm655
        %vm704 = vmand %vm680, %vm656
        %vm705 = vmand %vm681, %vm657
        %vm706 = vmand %vm682, %vm658
        %vm707 = vmand %vm683, %vm659
        %vm708 = vmand %vm684, %vm660
        %vm709 = vmand %vm685, %vm661
        %vm710 = vmand %vm686, %vm662
        %vm711 = vmand %vm687, %vm663
        %vm712 = vmand %vm688, %vm664
        %vm713 = vmand %vm689, %vm665
        %vm714 = vmand %vm690, %vm666
        %vm715 = vmand %vm691, %vm667
        %vm716 = vmand %vm692, %vm668
        %vm717 = vmand %vm693, %vm669
        %vm718 = vmand %vm694, %vm670
        %vm719 = vmand %vm695, %vm671
        %vm720 = vmand %vm696, %vm672
        %vm721 = vmand %vm697, %vm673
        %vm722 = vmand %vm698, %vm674
        %v723 = vadd.s32 %v397, 24
        %v724 = vadd.s32 %v408, 24
        %v725 = vadd.s32 %v419, 24
        %v726 = vadd.s32 %v430, 24
        %v727 = vadd.s32 %v441, 24
        %v728 = vadd.s32 %v452, 24
        %v729 = vadd.s32 %v463, 24
        %v730 = vadd.s32 %v474, 24
        %v731 = vadd.s32 %v485, 24
        %v732 = vadd.s32 %v496, 24
        %v733 = vadd.s32 %v507, 24
        %v734 = vadd.s32 %v518, 24
        %v735 = vadd.s32 %v529, 24
        %v736 = vadd.s32 %v540, 24
        %v737 = vadd.s32 %v551, 24
        %v738 = vadd.s32 %v562, 24
        %v739 = vadd.s32 %v573, 24
        %v740 = vadd.s32 %v584, 24
        %v741 = vadd.s32 %v595, 24
        %v742 = vadd.s32 %v606, 24
        %v743 = vadd.s32 %v617, 24
        %v744 = vadd.s32 %v628, 24
        %v745 = vadd.s32 %v639, 24
        %v746 = vadd.s32 %v650, 24
        %v747 = vsel %vm699, %v723, %v397
        %v748 = vsel %vm700, %v724, %v408
        %v749 = vsel %vm701, %v725, %v419
        %v750 = vsel %vm702, %v726, %v430
        %v751 = vsel %vm703, %v727, %v441
        %v752 = vsel %vm704, %v728, %v452
        %v753 = vsel %vm705, %v729, %v463
        %v754 = vsel %vm706, %v730, %v474
        %v755 = vsel %vm707, %v731, %v485
        %v756 = vsel %vm708, %v732, %v496
        %v757 = vsel %vm709, %v733, %v507
        %v758 = vsel %vm710, %v734, %v518
        %v759 = vsel %vm711, %v735, %v529
        %v760 = vsel %vm712, %v736, %v540
        %v761 = vsel %vm713, %v737, %v551
        %v762 = vsel %vm714, %v738, %v562
        %v763 = vsel %vm715, %v739, %v573
        %v764 = vsel %vm716, %v740, %v584
        %v765 = vsel %vm717, %v741, %v595
        %v766 = vsel %vm718, %v742, %v606
        %v767 = vsel %vm719, %v743, %v617
        %v768 = vsel %vm720, %v744, %v628
        %v769 = vsel %vm721, %v745, %v639
        %v770 = vsel %vm722, %v746, %v650
        %vm771 = vcmp.eq.s32.totalorder %v747, 0
        %vm772 = vcmp.eq.s32.totalorder %v748, 0
        %vm773 = vcmp.eq.s32.totalorder %v749, 0
        %vm774 = vcmp.eq.s32.totalorder %v750, 0
        %vm775 = vcmp.eq.s32.totalorder %v751, 0
        %vm776 = vcmp.eq.s32.totalorder %v752, 0
        %vm777 = vcmp.eq.s32.totalorder %v753, 0
        %vm778 = vcmp.eq.s32.totalorder %v754, 0
        %vm779 = vcmp.eq.s32.totalorder %v755, 0
        %vm780 = vcmp.eq.s32.totalorder %v756, 0
        %vm781 = vcmp.eq.s32.totalorder %v757, 0
        %vm782 = vcmp.eq.s32.totalorder %v758, 0
        %vm783 = vcmp.eq.s32.totalorder %v759, 0
        %vm784 = vcmp.eq.s32.totalorder %v760, 0
        %vm785 = vcmp.eq.s32.totalorder %v761, 0
        %vm786 = vcmp.eq.s32.totalorder %v762, 0
        %vm787 = vcmp.eq.s32.totalorder %v763, 0
        %vm788 = vcmp.eq.s32.totalorder %v764, 0
        %vm789 = vcmp.eq.s32.totalorder %v765, 0
        %vm790 = vcmp.eq.s32.totalorder %v766, 0
        %vm791 = vcmp.eq.s32.totalorder %v767, 0
        %vm792 = vcmp.eq.s32.totalorder %v768, 0
        %vm793 = vcmp.eq.s32.totalorder %v769, 0
        %vm794 = vcmp.eq.s32.totalorder %v770, 0
        %v795 = vrot.slane %v338, 7
        %v796 = vrot.slane %v339, 7
        %v797 = vrot.slane %v340, 7
        %v798 = vrot.slane %v341, 7
        %v799 = vrot.slane %v342, 7
        %v800 = vrot.slane %v343, 7
        %v801 = vrot.slane %v344, 7
        %v802 = vrot.slane %v345, 7
        %v803 = vrot.slane %v346, 7
        %v804 = vrot.slane %v347, 7
        %v805 = vrot.slane %v348, 7
        %v806 = vrot.slane %v349, 7
        %v807 = vrot.slane %v350, 7
        %v808 = vrot.slane %v351, 7
        %v809 = vrot.slane %v352, 7
        %v810 = vrot.slane %v353, 7
        %v811 = vrot.slane %v354, 7
        %v812 = vrot.slane %v355, 7
        %v813 = vrot.slane %v356, 7
        %v814 = vrot.slane %v357, 7
        %v815 = vrot.slane %v358, 7
        %v816 = vrot.slane %v359, 7
        %v817 = vrot.slane %v360, 7
        %v818 = vrot.slane %v361, 7
        %vm819 = vcmp.lt.s32.totalorder %v363, 1
        %v820 = vsel %vm819, %v817, %v818
        %v821 = vsel %vm819, %v816, %v817
        %v822 = vsel %vm819, %v815, %v816
        %v823 = vsel %vm819, %v814, %v815
        %v824 = vsel %vm819, %v813, %v814
        %v825 = vsel %vm819, %v812, %v813
        %v826 = vsel %vm819, %v811, %v812
        %v827 = vsel %vm819, %v810, %v811
        %v828 = vsel %vm819, %v809, %v810
        %v829 = vsel %vm819, %v808, %v809
        %v830 = vsel %vm819, %v807, %v808
        %v831 = vsel %vm819, %v806, %v807
        %v832 = vsel %vm819, %v805, %v806
        %v833 = vsel %vm819, %v804, %v805
        %v834 = vsel %vm819, %v803, %v804
        %v835 = vsel %vm819, %v802, %v803
        %v836 = vsel %vm819, %v801, %v802
        %v837 = vsel %vm819, %v800, %v801
        %v838 = vsel %vm819, %v799, %v800
        %v839 = vsel %vm819, %v798, %v799
        %v840 = vsel %vm819, %v797, %v798
        %v841 = vsel %vm819, %v796, %v797
        %v842 = vsel %vm819, %v795, %v796
        %v843 = vsel %vm819, %v818, %v795
        %v844 = vsel %vm771, 0.0, %v843
        %v845 = vsel %vm772, 0.0, %v842
        %v846 = vsel %vm773, 0.0, %v841
        %v847 = vsel %vm774, 0.0, %v840
        %v848 = vsel %vm775, 0.0, %v839
        %v849 = vsel %vm776, 0.0, %v838
        %v850 = vsel %vm777, 0.0, %v837
        %v851 = vsel %vm778, 0.0, %v836
        %v852 = vsel %vm779, 0.0, %v835
        %v853 = vsel %vm780, 0.0, %v834
        %v854 = vsel %vm781, 0.0, %v833
        %v855 = vsel %vm782, 0.0, %v832
        %v856 = vsel %vm783, 0.0, %v831
        %v857 = vsel %vm784, 0.0, %v830
        %v858 = vsel %vm785, 0.0, %v829
        %v859 = vsel %vm786, 0.0, %v828
        %v860 = vsel %vm787, 0.0, %v827
        %v861 = vsel %vm788, 0.0, %v826
        %v862 = vsel %vm789, 0.0, %v825
        %v863 = vsel %vm790, 0.0, %v824
        %v864 = vsel %vm791, 0.0, %v823
        %v865 = vsel %vm792, 0.0, %v822
        %v866 = vsel %vm793, 0.0, %v821
        %v867 = vsel %vm794, 0.0, %v820
        %vm868 = vcmp.eq.s32.totalorder %v747, 23
        %vm869 = vcmp.eq.s32.totalorder %v748, 23
        %vm870 = vcmp.eq.s32.totalorder %v749, 23
        %vm871 = vcmp.eq.s32.totalorder %v750, 23
        %vm872 = vcmp.eq.s32.totalorder %v751, 23
        %vm873 = vcmp.eq.s32.totalorder %v752, 23
        %vm874 = vcmp.eq.s32.totalorder %v753, 23
        %vm875 = vcmp.eq.s32.totalorder %v754, 23
        %vm876 = vcmp.eq.s32.totalorder %v755, 23
        %vm877 = vcmp.eq.s32.totalorder %v756, 23
        %vm878 = vcmp.eq.s32.totalorder %v757, 23
        %vm879 = vcmp.eq.s32.totalorder %v758, 23
        %vm880 = vcmp.eq.s32.totalorder %v759, 23
        %vm881 = vcmp.eq.s32.totalorder %v760, 23
        %vm882 = vcmp.eq.s32.totalorder %v761, 23
        %vm883 = vcmp.eq.s32.totalorder %v762, 23
        %vm884 = vcmp.eq.s32.totalorder %v763, 23
        %vm885 = vcmp.eq.s32.totalorder %v764, 23
        %vm886 = vcmp.eq.s32.totalorder %v765, 23
        %vm887 = vcmp.eq.s32.totalorder %v766, 23
        %vm888 = vcmp.eq.s32.totalorder %v767, 23
        %vm889 = vcmp.eq.s32.totalorder %v768, 23
        %vm890 = vcmp.eq.s32.totalorder %v769, 23
        %vm891 = vcmp.eq.s32.totalorder %v770, 23
        %v892 = vrot.slane %v338, 1
        %v893 = vrot.slane %v339, 1
        %v894 = vrot.slane %v340, 1
        %v895 = vrot.slane %v341, 1
        %v896 = vrot.slane %v342, 1
        %v897 = vrot.slane %v343, 1
        %v898 = vrot.slane %v344, 1
        %v899 = vrot.slane %v345, 1
        %v900 = vrot.slane %v346, 1
        %v901 = vrot.slane %v347, 1
        %v902 = vrot.slane %v348, 1
        %v903 = vrot.slane %v349, 1
        %v904 = vrot.slane %v350, 1
        %v905 = vrot.slane %v351, 1
        %v906 = vrot.slane %v352, 1
        %v907 = vrot.slane %v353, 1
        %v908 = vrot.slane %v354, 1
        %v909 = vrot.slane %v355, 1
        %v910 = vrot.slane %v356, 1
        %v911 = vrot.slane %v357, 1
        %v912 = vrot.slane %v358, 1
        %v913 = vrot.slane %v359, 1
        %v914 = vrot.slane %v360, 1
        %v915 = vrot.slane %v361, 1
        %vm916 = vcmp.lt.s32.totalorder %v363, 7
        %v917 = vsel %vm916, %v914, %v915
        %v918 = vsel %vm916, %v913, %v914
        %v919 = vsel %vm916, %v912, %v913
        %v920 = vsel %vm916, %v911, %v912
        %v921 = vsel %vm916, %v910, %v911
        %v922 = vsel %vm916, %v909, %v910
        %v923 = vsel %vm916, %v908, %v909
        %v924 = vsel %vm916, %v907, %v908
        %v925 = vsel %vm916, %v906, %v907
        %v926 = vsel %vm916, %v905, %v906
        %v927 = vsel %vm916, %v904, %v905
        %v928 = vsel %vm916, %v903, %v904
        %v929 = vsel %vm916, %v902, %v903
        %v930 = vsel %vm916, %v901, %v902
        %v931 = vsel %vm916, %v900, %v901
        %v932 = vsel %vm916, %v899, %v900
        %v933 = vsel %vm916, %v898, %v899
        %v934 = vsel %vm916, %v897, %v898
        %v935 = vsel %vm916, %v896, %v897
        %v936 = vsel %vm916, %v895, %v896
        %v937 = vsel %vm916, %v894, %v895
        %v938 = vsel %vm916, %v893, %v894
        %v939 = vsel %vm916, %v892, %v893
        %v940 = vsel %vm916, %v915, %v892
        %v941 = vsel %vm868, 0.0, %v939
        %v942 = vsel %vm869, 0.0, %v938
        %v943 = vsel %vm870, 0.0, %v937
        %v944 = vsel %vm871, 0.0, %v936
        %v945 = vsel %vm872, 0.0, %v935
        %v946 = vsel %vm873, 0.0, %v934
        %v947 = vsel %vm874, 0.0, %v933
        %v948 = vsel %vm875, 0.0, %v932
        %v949 = vsel %vm876, 0.0, %v931
        %v950 = vsel %vm877, 0.0, %v930
        %v951 = vsel %vm878, 0.0, %v929
        %v952 = vsel %vm879, 0.0, %v928
        %v953 = vsel %vm880, 0.0, %v927
        %v954 = vsel %vm881, 0.0, %v926
        %v955 = vsel %vm882, 0.0, %v925
        %v956 = vsel %vm883, 0.0, %v924
        %v957 = vsel %vm884, 0.0, %v923
        %v958 = vsel %vm885, 0.0, %v922
        %v959 = vsel %vm886, 0.0, %v921
        %v960 = vsel %vm887, 0.0, %v920
        %v961 = vsel %vm888, 0.0, %v919
        %v962 = vsel %vm889, 0.0, %v918
        %v963 = vsel %vm890, 0.0, %v917
        %v964 = vsel %vm891, 0.0, %v940
        %v965 = vpack.c.bf16 %v845, %v844
        %v966 = vpack.c.bf16 %v339, %v338
        %v967 = vpack.c.bf16 %v942, %v941
        %v968 = vpack.c.bf16 %v847, %v846
        %v969 = vpack.c.bf16 %v341, %v340
        %v970 = vpack.c.bf16 %v944, %v943
        %v971 = vpack.c.bf16 %v849, %v848
        %v972 = vpack.c.bf16 %v343, %v342
        %v973 = vpack.c.bf16 %v946, %v945
        %v974 = vpack.c.bf16 %v851, %v850
        %v975 = vpack.c.bf16 %v345, %v344
        %v976 = vpack.c.bf16 %v948, %v947
        %v977 = vpack.c.bf16 %v853, %v852
        %v978 = vpack.c.bf16 %v347, %v346
        %v979 = vpack.c.bf16 %v950, %v949
        %v980 = vpack.c.bf16 %v855, %v854
        %v981 = vpack.c.bf16 %v349, %v348
        %v982 = vpack.c.bf16 %v952, %v951
        %v983 = vpack.c.bf16 %v857, %v856
        %v984 = vpack.c.bf16 %v351, %v350
        %v985 = vpack.c.bf16 %v954, %v953
        %v986 = vpack.c.bf16 %v859, %v858
        %v987 = vpack.c.bf16 %v353, %v352
        %v988 = vpack.c.bf16 %v956, %v955
        %v989 = vpack.c.bf16 %v861, %v860
        %v990 = vpack.c.bf16 %v355, %v354
        %v991 = vpack.c.bf16 %v958, %v957
        %v992 = vpack.c.bf16 %v863, %v862
        %v993 = vpack.c.bf16 %v357, %v356
        %v994 = vpack.c.bf16 %v960, %v959
        %v995 = vpack.c.bf16 %v865, %v864
        %v996 = vpack.c.bf16 %v359, %v358
        %v997 = vpack.c.bf16 %v962, %v961
        %v998 = vpack.c.bf16 %v867, %v866
        %v999 = vpack.c.bf16 %v361, %v360
        %v1000 = vpack.c.bf16 %v964, %v963
        %v1001 = vld [vmem:[%s1] sm:$0xf]
        %v1002 = vld [vmem:[%s1 + $0x4] sm:$0xf]
        %v1003 = vld [vmem:[%s1 + $0x8] sm:$0xf]
        %v1004 = vld [vmem:[%s1 + $0xc] sm:$0xf]
        %v1005 = vld [vmem:[%s1 + $0x10] sm:$0xf]
        %v1006 = vld [vmem:[%s1 + $0x14] sm:$0xf]
        %v1007 = vld [vmem:[%s1 + $0x18] sm:$0xf]
        %v1008 = vld [vmem:[%s1 + $0x1c] sm:$0xf]
        %v1009 = vld [vmem:[%s1 + $0x20] sm:$0xf]
        %v1010 = vld [vmem:[%s1 + $0x24] sm:$0xf]
        %v1011 = vld [vmem:[%s1 + $0x28] sm:$0xf]
        %v1012 = vld [vmem:[%s1 + $0x2c] sm:$0xf]
        %v1013 = vld [vmem:[%s1 + $0x30] sm:$0xf]
        %v1014 = vld [vmem:[%s1 + $0x34] sm:$0xf]
        %v1015 = vld [vmem:[%s1 + $0x38] sm:$0xf]
        %v1016 = vld [vmem:[%s1 + $0x3c] sm:$0xf]
        %v1017 = vld [vmem:[%s1 + $0x40] sm:$0xf]
        %v1018 = vld [vmem:[%s1 + $0x44] sm:$0xf]
        %v1019 = vld [vmem:[%s1 + $0x48] sm:$0xf]
        %v1020 = vld [vmem:[%s1 + $0x4c] sm:$0xf]
        %v1021 = vld [vmem:[%s1 + $0x50] sm:$0xf]
        %v1022 = vld [vmem:[%s1 + $0x54] sm:$0xf]
        %v1023 = vld [vmem:[%s1 + $0x58] sm:$0xf]
        %v1024 = vld [vmem:[%s1 + $0x5c] sm:$0xf]
        %v1025 = vld [vmem:[%s1 + $0x60] sm:$0xf]
        %v1026 = vld [vmem:[%s1 + $0x64] sm:$0xf]
        %v1027 = vld [vmem:[%s1 + $0x68] sm:$0xf]
        %v1028 = vld [vmem:[%s1 + $0x6c] sm:$0xf]
        %v1029 = vld [vmem:[%s1 + $0x70] sm:$0xf]
        %v1030 = vld [vmem:[%s1 + $0x74] sm:$0xf]
        %v1031 = vld [vmem:[%s1 + $0x78] sm:$0xf]
        %v1032 = vld [vmem:[%s1 + $0x7c] sm:$0xf]
        %v1033 = vld [vmem:[%s1 + $0x80] sm:$0xf]
        %v1034 = vld [vmem:[%s1 + $0x84] sm:$0xf]
        %v1035 = vld [vmem:[%s1 + $0x88] sm:$0xf]
        %v1036 = vld [vmem:[%s1 + $0x8c] sm:$0xf]
        %v1037 = vld [vmem:[%s1 + $0x90] sm:$0xf]
        %v1038 = vld [vmem:[%s1 + $0x94] sm:$0xf]
        %v1039 = vld [vmem:[%s1 + $0x98] sm:$0xf]
        %v1040 = vld [vmem:[%s1 + $0x9c] sm:$0xf]
        %v1041 = vld [vmem:[%s1 + $0xa0] sm:$0xf]
        %v1042 = vld [vmem:[%s1 + $0xa4] sm:$0xf]
        %v1043 = vld [vmem:[%s1 + $0xa8] sm:$0xf]
        %v1044 = vld [vmem:[%s1 + $0xac] sm:$0xf]
        %v1045 = vld [vmem:[%s1 + $0xb0] sm:$0xf]
        %v1046 = vld [vmem:[%s1 + $0xb4] sm:$0xf]
        %v1047 = vld [vmem:[%s1 + $0xb8] sm:$0xf]
        %v1048 = vld [vmem:[%s1 + $0xbc] sm:$0xf]
        %v1049 = vld [vmem:[%s2] sm:$0x1]
        %v1051 = vlaneseq
        %v1052 = vshrl.u32 %v1051, 7
        %v1053 = vsub.s32 0, %v1052
        %v1054 = vrot.slane %v1049, %v1053
        %v1104 = vunpack.c.l.b16 %v1001
        %v1105 = vunpack.c.l.b16 %v1002
        %v1106 = vunpack.c.l.b16 %v1003
        %v1107 = vunpack.c.l.b16 %v1004
        %v1108 = vunpack.c.l.b16 %v1005
        %v1109 = vunpack.c.l.b16 %v1006
        %v1110 = vunpack.c.l.b16 %v1007
        %v1111 = vunpack.c.l.b16 %v1008
        %v1112 = vunpack.c.l.b16 %v1009
        %v1113 = vunpack.c.l.b16 %v1010
        %v1114 = vunpack.c.l.b16 %v1011
        %v1115 = vunpack.c.l.b16 %v1012
        %v1116 = vunpack.c.l.b16 %v1013
        %v1117 = vunpack.c.l.b16 %v1014
        %v1118 = vunpack.c.l.b16 %v1015
        %v1119 = vunpack.c.l.b16 %v1016
        %v1120 = vunpack.c.l.b16 %v1017
        %v1121 = vunpack.c.l.b16 %v1018
        %v1122 = vunpack.c.l.b16 %v1019
        %v1123 = vunpack.c.l.b16 %v1020
        %v1124 = vunpack.c.l.b16 %v1021
        %v1125 = vunpack.c.l.b16 %v1022
        %v1126 = vunpack.c.l.b16 %v1023
        %v1127 = vunpack.c.l.b16 %v1024
        %v1128 = vunpack.c.l.b16 %v1025
        %v1129 = vunpack.c.l.b16 %v1026
        %v1130 = vunpack.c.l.b16 %v1027
        %v1131 = vunpack.c.l.b16 %v1028
        %v1132 = vunpack.c.l.b16 %v1029
        %v1133 = vunpack.c.l.b16 %v1030
        %v1134 = vunpack.c.l.b16 %v1031
        %v1135 = vunpack.c.l.b16 %v1032
        %v1136 = vunpack.c.l.b16 %v1033
        %v1137 = vunpack.c.l.b16 %v1034
        %v1138 = vunpack.c.l.b16 %v1035
        %v1139 = vunpack.c.l.b16 %v1036
        %v1140 = vunpack.c.l.b16 %v1037
        %v1141 = vunpack.c.l.b16 %v1038
        %v1142 = vunpack.c.l.b16 %v1039
        %v1143 = vunpack.c.l.b16 %v1040
        %v1144 = vunpack.c.l.b16 %v1041
        %v1145 = vunpack.c.l.b16 %v1042
        %v1146 = vunpack.c.l.b16 %v1043
        %v1147 = vunpack.c.l.b16 %v1044
        %v1148 = vunpack.c.l.b16 %v1045
        %v1149 = vunpack.c.l.b16 %v1046
        %v1150 = vunpack.c.l.b16 %v1047
        %v1151 = vunpack.c.l.b16 %v1048
        %v1152 = vpack.c.b16 %v1105, %v1104
        %v1153 = vpack.c.b16 %v1107, %v1106
        %v1154 = vpack.c.b16 %v1109, %v1108
        %v1155 = vpack.c.b16 %v1111, %v1110
        %v1156 = vpack.c.b16 %v1113, %v1112
        %v1157 = vpack.c.b16 %v1115, %v1114
        %v1158 = vpack.c.b16 %v1117, %v1116
        %v1159 = vpack.c.b16 %v1119, %v1118
        %v1160 = vpack.c.b16 %v1121, %v1120
        %v1161 = vpack.c.b16 %v1123, %v1122
        %v1162 = vpack.c.b16 %v1125, %v1124
        %v1163 = vpack.c.b16 %v1127, %v1126
        %v1164 = vpack.c.b16 %v1129, %v1128
        %v1165 = vpack.c.b16 %v1131, %v1130
        %v1166 = vpack.c.b16 %v1133, %v1132
        %v1167 = vpack.c.b16 %v1135, %v1134
        %v1168 = vpack.c.b16 %v1137, %v1136
        %v1169 = vpack.c.b16 %v1139, %v1138
        %v1170 = vpack.c.b16 %v1141, %v1140
        %v1171 = vpack.c.b16 %v1143, %v1142
        %v1172 = vpack.c.b16 %v1145, %v1144
        %v1173 = vpack.c.b16 %v1147, %v1146
        %v1174 = vpack.c.b16 %v1149, %v1148
        %v1175 = vpack.c.b16 %v1151, %v1150
        %1200 = vmatprep.subr.bf16.mxu0 0
        %1201 = vmatpush1.bf16.msra.mxu0 %v1152
        %1202 = vmatprep.subr.bf16.mxu0 0
        %1203 = vmatpush1.bf16.msra.mxu0 %v1153
        %1204 = vmatprep.subr.bf16.mxu0 0
        %1205 = vmatpush1.bf16.msra.mxu0 %v1154
        %1206 = vmatprep.subr.bf16.mxu0 0
        %1207 = vmatpush1.bf16.msra.mxu0 %v1155
        %1208 = vmatprep.subr.bf16.mxu0 0
        %1209 = vmatpush1.bf16.msra.mxu0 %v1156
        %1210 = vmatprep.subr.bf16.mxu0 0
        %1211 = vmatpush1.bf16.msra.mxu0 %v1157
        %1212 = vmatprep.subr.bf16.mxu0 0
        %1213 = vmatpush1.bf16.msra.mxu0 %v1158
        %1214 = vmatprep.subr.bf16.mxu0 0
        %1215 = vmatpush1.bf16.msra.mxu0 %v1159
        %1216 = vmatprep.subr.bf16.mxu0 0
        %1217 = vmatpush1.bf16.msra.mxu0 %v1160
        %1218 = vmatprep.subr.bf16.mxu0 0
        %1219 = vmatpush1.bf16.msra.mxu0 %v1161
        %1220 = vmatprep.subr.bf16.mxu0 0
        %1221 = vmatpush1.bf16.msra.mxu0 %v1162
        %1222 = vmatprep.subr.bf16.mxu0 0
        %1223 = vmatpush1.bf16.msra.mxu0 %v1163
        %1224 = vmatprep.subr.bf16.mxu0 0
        %1225 = vmatpush1.bf16.msra.mxu0 %v1164
        %1226 = vmatprep.subr.bf16.mxu0 0
        %1227 = vmatpush1.bf16.msra.mxu0 %v1165
        %1228 = vmatprep.subr.bf16.mxu0 0
        %1229 = vmatpush1.bf16.msra.mxu0 %v1166
        %1230 = vmatprep.subr.bf16.mxu0 0
        %1231 = vmatpush1.bf16.msra.mxu0 %v1167
        %1232 = vmatprep.mubr.bf16.mxu0 %v966
        %1233 = vmatmul.mubr.bf16.gmra.mrb[0].mxu0 %v965
        %v1234 = vpop.f32.mrb[0].mxu0
        %v1235 = vadd.f32 %v1054, %v1234
        %v1236 = vpop.f32.mrb[0].mxu0
        %v1237 = vpop.f32.mrb[0].mxu0
        %v1238 = vadd.f32 %v1054, %v1237
        %v1239 = vpop.f32.mrb[0].mxu0
        %1240 = vmatprep.mubr.bf16.mxu0 %v969
        %1241 = vmatmul.mubr.bf16.gmra.mrb[0].mxu0 %v968
        %v1242 = vpop.f32.mrb[0].mxu0
        %v1243 = vadd.f32 %v1054, %v1242
        %v1244 = vpop.f32.mrb[0].mxu0
        %v1245 = vpop.f32.mrb[0].mxu0
        %v1246 = vadd.f32 %v1054, %v1245
        %v1247 = vpop.f32.mrb[0].mxu0
        %1248 = vmatprep.mubr.bf16.mxu0 %v972
        %1249 = vmatmul.mubr.bf16.gmra.mrb[0].mxu0 %v971
        %v1250 = vpop.f32.mrb[0].mxu0
        %v1251 = vadd.f32 %v1054, %v1250
        %v1252 = vpop.f32.mrb[0].mxu0
        %v1253 = vpop.f32.mrb[0].mxu0
        %v1254 = vadd.f32 %v1054, %v1253
        %v1255 = vpop.f32.mrb[0].mxu0
        %1256 = vmatprep.mubr.bf16.mxu0 %v975
        %1257 = vmatmul.mubr.bf16.gmra.mrb[0].mxu0 %v974
        %v1258 = vpop.f32.mrb[0].mxu0
        %v1259 = vadd.f32 %v1054, %v1258
        %v1260 = vpop.f32.mrb[0].mxu0
        %v1261 = vpop.f32.mrb[0].mxu0
        %v1262 = vadd.f32 %v1054, %v1261
        %v1263 = vpop.f32.mrb[0].mxu0
        %1264 = vmatprep.mubr.bf16.mxu0 %v978
        %1265 = vmatmul.mubr.bf16.gmra.mrb[0].mxu0 %v977
        %v1266 = vpop.f32.mrb[0].mxu0
        %v1267 = vadd.f32 %v1054, %v1266
        %v1268 = vpop.f32.mrb[0].mxu0
        %v1269 = vpop.f32.mrb[0].mxu0
        %v1270 = vadd.f32 %v1054, %v1269
        %v1271 = vpop.f32.mrb[0].mxu0
        %1272 = vmatprep.mubr.bf16.mxu0 %v981
        %1273 = vmatmul.mubr.bf16.gmra.mrb[0].mxu0 %v980
        %v1274 = vpop.f32.mrb[0].mxu0
        %v1275 = vadd.f32 %v1054, %v1274
        %v1276 = vpop.f32.mrb[0].mxu0
        %v1277 = vpop.f32.mrb[0].mxu0
        %v1278 = vadd.f32 %v1054, %v1277
        %v1279 = vpop.f32.mrb[0].mxu0
        %1280 = vmatprep.mubr.bf16.mxu0 %v984
        %1281 = vmatmul.mubr.bf16.gmra.mrb[0].mxu0 %v983
        %v1282 = vpop.f32.mrb[0].mxu0
        %v1283 = vadd.f32 %v1054, %v1282
        %v1284 = vpop.f32.mrb[0].mxu0
        %v1285 = vpop.f32.mrb[0].mxu0
        %v1286 = vadd.f32 %v1054, %v1285
        %v1287 = vpop.f32.mrb[0].mxu0
        %1288 = vmatprep.mubr.bf16.mxu0 %v987
        %1289 = vmatmul.mubr.bf16.gmra.mrb[0].mxu0 %v986
        %v1290 = vpop.f32.mrb[0].mxu0
        %v1291 = vadd.f32 %v1054, %v1290
        %v1292 = vpop.f32.mrb[0].mxu0
        %v1293 = vpop.f32.mrb[0].mxu0
        %v1294 = vadd.f32 %v1054, %v1293
        %v1295 = vpop.f32.mrb[0].mxu0
        %1296 = vmatprep.mubr.bf16.mxu0 %v990
        %1297 = vmatmul.mubr.bf16.gmra.mrb[0].mxu0 %v989
        %v1298 = vpop.f32.mrb[0].mxu0
        %v1299 = vadd.f32 %v1054, %v1298
        %v1300 = vpop.f32.mrb[0].mxu0
        %v1301 = vpop.f32.mrb[0].mxu0
        %v1302 = vadd.f32 %v1054, %v1301
        %v1303 = vpop.f32.mrb[0].mxu0
        %1304 = vmatprep.mubr.bf16.mxu0 %v993
        %1305 = vmatmul.mubr.bf16.gmra.mrb[0].mxu0 %v992
        %v1306 = vpop.f32.mrb[0].mxu0
        %v1307 = vadd.f32 %v1054, %v1306
        %v1308 = vpop.f32.mrb[0].mxu0
        %v1309 = vpop.f32.mrb[0].mxu0
        %v1310 = vadd.f32 %v1054, %v1309
        %v1311 = vpop.f32.mrb[0].mxu0
        %1312 = vmatprep.mubr.bf16.mxu0 %v996
        %1313 = vmatmul.mubr.bf16.gmra.mrb[0].mxu0 %v995
        %v1314 = vpop.f32.mrb[0].mxu0
        %v1315 = vadd.f32 %v1054, %v1314
        %v1316 = vpop.f32.mrb[0].mxu0
        %v1317 = vpop.f32.mrb[0].mxu0
        %v1318 = vadd.f32 %v1054, %v1317
        %v1319 = vpop.f32.mrb[0].mxu0
        %1320 = vmatprep.mubr.bf16.mxu0 %v999
        %1321 = vmatmul.mubr.bf16.gmra.mrb[0].mxu0 %v998
        %v1322 = vpop.f32.mrb[0].mxu0
        %v1323 = vadd.f32 %v1054, %v1322
        %v1324 = vpop.f32.mrb[0].mxu0
        %v1325 = vpop.f32.mrb[0].mxu0
        %v1326 = vadd.f32 %v1054, %v1325
        %v1327 = vpop.f32.mrb[0].mxu0
        %1328 = vdwg.mxu0
        %1329 = vmatprep.subr.bf16.mxu0 0
        %1330 = vmatpush1.bf16.msra.mxu0 %v1168
        %1331 = vmatprep.subr.bf16.mxu0 0
        %1332 = vmatpush1.bf16.msra.mxu0 %v1169
        %1333 = vmatprep.subr.bf16.mxu0 0
        %1334 = vmatpush1.bf16.msra.mxu0 %v1170
        %1335 = vmatprep.subr.bf16.mxu0 0
        %1336 = vmatpush1.bf16.msra.mxu0 %v1171
        %1337 = vmatprep.subr.bf16.mxu0 0
        %1338 = vmatpush1.bf16.msra.mxu0 %v1172
        %1339 = vmatprep.subr.bf16.mxu0 0
        %1340 = vmatpush1.bf16.msra.mxu0 %v1173
        %1341 = vmatprep.subr.bf16.mxu0 0
        %1342 = vmatpush1.bf16.msra.mxu0 %v1174
        %1343 = vmatprep.subr.bf16.mxu0 0
        %1344 = vmatpush1.bf16.msra.mxu0 %v1175
        %1345 = vmatprep.subr.bf16.mxu0 0
        %1346 = vmatpush1.bf16.msra.mxu0 0
        %1347 = vmatprep.subr.bf16.mxu0 0
        %1348 = vmatpush1.bf16.msra.mxu0 0
        %1349 = vmatprep.subr.bf16.mxu0 0
        %1350 = vmatpush1.bf16.msra.mxu0 0
        %1351 = vmatprep.subr.bf16.mxu0 0
        %1352 = vmatpush1.bf16.msra.mxu0 0
        %1353 = vmatprep.subr.bf16.mxu0 0
        %1354 = vmatpush1.bf16.msra.mxu0 0
        %1355 = vmatprep.subr.bf16.mxu0 0
        %1356 = vmatpush1.bf16.msra.mxu0 0
        %1357 = vmatprep.subr.bf16.mxu0 0
        %1358 = vmatpush1.bf16.msra.mxu0 0
        %1359 = vmatprep.subr.bf16.mxu0 0
        %1360 = vmatpush1.bf16.msra.mxu0 0
        %1361 = vmatprep.mubr.bf16.mxu0 0
        %1362 = vmatmul.mubr.bf16.gmra.mrb[0].mxu0 %v967
        %v1363 = vpop.f32.mrb[0].mxu0
        %v1364 = vadd.f32 %v1235, %v1363
        %v1365 = vpop.f32.mrb[0].mxu0
        %v1366 = vpop.f32.mrb[0].mxu0
        %v1367 = vadd.f32 %v1238, %v1366
        %v1368 = vpop.f32.mrb[0].mxu0
        %1369 = vmatprep.mubr.bf16.mxu0 0
        %1370 = vmatmul.mubr.bf16.gmra.mrb[0].mxu0 %v970
        %v1371 = vpop.f32.mrb[0].mxu0
        %v1372 = vadd.f32 %v1243, %v1371
        %v1373 = vpop.f32.mrb[0].mxu0
        %v1374 = vpop.f32.mrb[0].mxu0
        %v1375 = vadd.f32 %v1246, %v1374
        %v1376 = vpop.f32.mrb[0].mxu0
        %1377 = vmatprep.mubr.bf16.mxu0 0
        %1378 = vmatmul.mubr.bf16.gmra.mrb[0].mxu0 %v973
        %v1379 = vpop.f32.mrb[0].mxu0
        %v1380 = vadd.f32 %v1251, %v1379
        %v1381 = vpop.f32.mrb[0].mxu0
        %v1382 = vpop.f32.mrb[0].mxu0
        %v1383 = vadd.f32 %v1254, %v1382
        %v1384 = vpop.f32.mrb[0].mxu0
        %1385 = vmatprep.mubr.bf16.mxu0 0
        %1386 = vmatmul.mubr.bf16.gmra.mrb[0].mxu0 %v976
        %v1387 = vpop.f32.mrb[0].mxu0
        %v1388 = vadd.f32 %v1259, %v1387
        %v1389 = vpop.f32.mrb[0].mxu0
        %v1390 = vpop.f32.mrb[0].mxu0
        %v1391 = vadd.f32 %v1262, %v1390
        %v1392 = vpop.f32.mrb[0].mxu0
        %1393 = vmatprep.mubr.bf16.mxu0 0
        %1394 = vmatmul.mubr.bf16.gmra.mrb[0].mxu0 %v979
        %v1395 = vpop.f32.mrb[0].mxu0
        %v1396 = vadd.f32 %v1267, %v1395
        %v1397 = vpop.f32.mrb[0].mxu0
        %v1398 = vpop.f32.mrb[0].mxu0
        %v1399 = vadd.f32 %v1270, %v1398
        %v1400 = vpop.f32.mrb[0].mxu0
        %1401 = vmatprep.mubr.bf16.mxu0 0
        %1402 = vmatmul.mubr.bf16.gmra.mrb[0].mxu0 %v982
        %v1403 = vpop.f32.mrb[0].mxu0
        %v1404 = vadd.f32 %v1275, %v1403
        %v1405 = vpop.f32.mrb[0].mxu0
        %v1406 = vpop.f32.mrb[0].mxu0
        %v1407 = vadd.f32 %v1278, %v1406
        %v1408 = vpop.f32.mrb[0].mxu0
        %1409 = vmatprep.mubr.bf16.mxu0 0
        %1410 = vmatmul.mubr.bf16.gmra.mrb[0].mxu0 %v985
        %v1411 = vpop.f32.mrb[0].mxu0
        %v1412 = vadd.f32 %v1283, %v1411
        %v1413 = vpop.f32.mrb[0].mxu0
        %v1414 = vpop.f32.mrb[0].mxu0
        %v1415 = vadd.f32 %v1286, %v1414
        %v1416 = vpop.f32.mrb[0].mxu0
        %1417 = vmatprep.mubr.bf16.mxu0 0
        %1418 = vmatmul.mubr.bf16.gmra.mrb[0].mxu0 %v988
        %v1419 = vpop.f32.mrb[0].mxu0
        %v1420 = vadd.f32 %v1291, %v1419
        %v1421 = vpop.f32.mrb[0].mxu0
        %v1422 = vpop.f32.mrb[0].mxu0
        %v1423 = vadd.f32 %v1294, %v1422
        %v1424 = vpop.f32.mrb[0].mxu0
        %1425 = vmatprep.mubr.bf16.mxu0 0
        %1426 = vmatmul.mubr.bf16.gmra.mrb[0].mxu0 %v991
        %v1427 = vpop.f32.mrb[0].mxu0
        %v1428 = vadd.f32 %v1299, %v1427
        %v1429 = vpop.f32.mrb[0].mxu0
        %v1430 = vpop.f32.mrb[0].mxu0
        %v1431 = vadd.f32 %v1302, %v1430
        %v1432 = vpop.f32.mrb[0].mxu0
        %1433 = vmatprep.mubr.bf16.mxu0 0
        %1434 = vmatmul.mubr.bf16.gmra.mrb[0].mxu0 %v994
        %v1435 = vpop.f32.mrb[0].mxu0
        %v1436 = vadd.f32 %v1307, %v1435
        %v1437 = vpop.f32.mrb[0].mxu0
        %v1438 = vpop.f32.mrb[0].mxu0
        %v1439 = vadd.f32 %v1310, %v1438
        %v1440 = vpop.f32.mrb[0].mxu0
        %1441 = vmatprep.mubr.bf16.mxu0 0
        %1442 = vmatmul.mubr.bf16.gmra.mrb[0].mxu0 %v997
        %v1443 = vpop.f32.mrb[0].mxu0
        %v1444 = vadd.f32 %v1315, %v1443
        %v1445 = vpop.f32.mrb[0].mxu0
        %v1446 = vpop.f32.mrb[0].mxu0
        %v1447 = vadd.f32 %v1318, %v1446
        %v1448 = vpop.f32.mrb[0].mxu0
        %1449 = vmatprep.mubr.bf16.mxu0 0
        %1450 = vmatmul.mubr.bf16.gmra.mrb[0].mxu0 %v1000
        %v1451 = vpop.f32.mrb[0].mxu0
        %v1452 = vadd.f32 %v1323, %v1451
        %v1453 = vpop.f32.mrb[0].mxu0
        %v1454 = vpop.f32.mrb[0].mxu0
        %v1455 = vadd.f32 %v1326, %v1454
        %v1456 = vpop.f32.mrb[0].mxu0
        %1457 = vdwg.mxu0
        %v1458 = vld [vmem:[%s3] sm:$0x1]
        %v1460 = vlaneseq
        %v1461 = vshrl.u32 %v1460, 7
        %v1462 = vsub.s32 0, %v1461
        %v1463 = vrot.slane %v1458, %v1462
        %v1465 = vmul.f32 %v1364, %v1463
        %v1466 = vmul.f32 %v1367, %v1463
        %v1467 = vmul.f32 %v1372, %v1463
        %v1468 = vmul.f32 %v1375, %v1463
        %v1469 = vmul.f32 %v1380, %v1463
        %v1470 = vmul.f32 %v1383, %v1463
        %v1471 = vmul.f32 %v1388, %v1463
        %v1472 = vmul.f32 %v1391, %v1463
        %v1473 = vmul.f32 %v1396, %v1463
        %v1474 = vmul.f32 %v1399, %v1463
        %v1475 = vmul.f32 %v1404, %v1463
        %v1476 = vmul.f32 %v1407, %v1463
        %v1477 = vmul.f32 %v1412, %v1463
        %v1478 = vmul.f32 %v1415, %v1463
        %v1479 = vmul.f32 %v1420, %v1463
        %v1480 = vmul.f32 %v1423, %v1463
        %v1481 = vmul.f32 %v1428, %v1463
        %v1482 = vmul.f32 %v1431, %v1463
        %v1483 = vmul.f32 %v1436, %v1463
        %v1484 = vmul.f32 %v1439, %v1463
        %v1485 = vmul.f32 %v1444, %v1463
        %v1486 = vmul.f32 %v1447, %v1463
        %v1487 = vmul.f32 %v1452, %v1463
        %v1488 = vmul.f32 %v1455, %v1463
        %v1489 = vld [vmem:[%s4] sm:$0x1]
        %v1491 = vlaneseq
        %v1492 = vshrl.u32 %v1491, 7
        %v1493 = vsub.s32 0, %v1492
        %v1494 = vrot.slane %v1489, %v1493
        %v1496 = vadd.f32 %v1465, %v1494
        %v1497 = vadd.f32 %v1466, %v1494
        %v1498 = vadd.f32 %v1467, %v1494
        %v1499 = vadd.f32 %v1468, %v1494
        %v1500 = vadd.f32 %v1469, %v1494
        %v1501 = vadd.f32 %v1470, %v1494
        %v1502 = vadd.f32 %v1471, %v1494
        %v1503 = vadd.f32 %v1472, %v1494
        %v1504 = vadd.f32 %v1473, %v1494
        %v1505 = vadd.f32 %v1474, %v1494
        %v1506 = vadd.f32 %v1475, %v1494
        %v1507 = vadd.f32 %v1476, %v1494
        %v1508 = vadd.f32 %v1477, %v1494
        %v1509 = vadd.f32 %v1478, %v1494
        %v1510 = vadd.f32 %v1479, %v1494
        %v1511 = vadd.f32 %v1480, %v1494
        %v1512 = vadd.f32 %v1481, %v1494
        %v1513 = vadd.f32 %v1482, %v1494
        %v1514 = vadd.f32 %v1483, %v1494
        %v1515 = vadd.f32 %v1484, %v1494
        %v1516 = vadd.f32 %v1485, %v1494
        %v1517 = vadd.f32 %v1486, %v1494
        %v1518 = vadd.f32 %v1487, %v1494
        %v1519 = vadd.f32 %v1488, %v1494
        %v1520 = vmul.f32 %v1496, 0.5
        %v1521 = vmul.f32 %v1497, 0.5
        %v1522 = vmul.f32 %v1498, 0.5
        %v1523 = vmul.f32 %v1499, 0.5
        %v1524 = vmul.f32 %v1500, 0.5
        %v1525 = vmul.f32 %v1501, 0.5
        %v1526 = vmul.f32 %v1502, 0.5
        %v1527 = vmul.f32 %v1503, 0.5
        %v1528 = vmul.f32 %v1504, 0.5
        %v1529 = vmul.f32 %v1505, 0.5
        %v1530 = vmul.f32 %v1506, 0.5
        %v1531 = vmul.f32 %v1507, 0.5
        %v1532 = vmul.f32 %v1508, 0.5
        %v1533 = vmul.f32 %v1509, 0.5
        %v1534 = vmul.f32 %v1510, 0.5
        %v1535 = vmul.f32 %v1511, 0.5
        %v1536 = vmul.f32 %v1512, 0.5
        %v1537 = vmul.f32 %v1513, 0.5
        %v1538 = vmul.f32 %v1514, 0.5
        %v1539 = vmul.f32 %v1515, 0.5
        %v1540 = vmul.f32 %v1516, 0.5
        %v1541 = vmul.f32 %v1517, 0.5
        %v1542 = vmul.f32 %v1518, 0.5
        %v1543 = vmul.f32 %v1519, 0.5
        %v1544 = vmul.f32 %v1496, 0.70710677
        %v1545 = vmul.f32 %v1497, 0.70710677
        %v1546 = vmul.f32 %v1498, 0.70710677
        %v1547 = vmul.f32 %v1499, 0.70710677
        %v1548 = vmul.f32 %v1500, 0.70710677
        %v1549 = vmul.f32 %v1501, 0.70710677
        %v1550 = vmul.f32 %v1502, 0.70710677
        %v1551 = vmul.f32 %v1503, 0.70710677
        %v1552 = vmul.f32 %v1504, 0.70710677
        %v1553 = vmul.f32 %v1505, 0.70710677
        %v1554 = vmul.f32 %v1506, 0.70710677
        %v1555 = vmul.f32 %v1507, 0.70710677
        %v1556 = vmul.f32 %v1508, 0.70710677
        %v1557 = vmul.f32 %v1509, 0.70710677
        %v1558 = vmul.f32 %v1510, 0.70710677
        %v1559 = vmul.f32 %v1511, 0.70710677
        %v1560 = vmul.f32 %v1512, 0.70710677
        %v1561 = vmul.f32 %v1513, 0.70710677
        %v1562 = vmul.f32 %v1514, 0.70710677
        %v1563 = vmul.f32 %v1515, 0.70710677
        %v1564 = vmul.f32 %v1516, 0.70710677
        %v1565 = vmul.f32 %v1517, 0.70710677
        %v1566 = vmul.f32 %v1518, 0.70710677
        %v1567 = vmul.f32 %v1519, 0.70710677
        %v1568 = verf.f32.pop %v1544
        %v1569 = verf.f32.pop %v1545
        %v1570 = verf.f32.pop %v1546
        %v1571 = verf.f32.pop %v1547
        %v1572 = verf.f32.pop %v1548
        %v1573 = verf.f32.pop %v1549
        %v1574 = verf.f32.pop %v1550
        %v1575 = verf.f32.pop %v1551
        %v1576 = verf.f32.pop %v1552
        %v1577 = verf.f32.pop %v1553
        %v1578 = verf.f32.pop %v1554
        %v1579 = verf.f32.pop %v1555
        %v1580 = verf.f32.pop %v1556
        %v1581 = verf.f32.pop %v1557
        %v1582 = verf.f32.pop %v1558
        %v1583 = verf.f32.pop %v1559
        %v1584 = verf.f32.pop %v1560
        %v1585 = verf.f32.pop %v1561
        %v1586 = verf.f32.pop %v1562
        %v1587 = verf.f32.pop %v1563
        %v1588 = verf.f32.pop %v1564
        %v1589 = verf.f32.pop %v1565
        %v1590 = verf.f32.pop %v1566
        %v1591 = verf.f32.pop %v1567
        %v1592 = vadd.f32 %v1568, 1.0
        %v1593 = vadd.f32 %v1569, 1.0
        %v1594 = vadd.f32 %v1570, 1.0
        %v1595 = vadd.f32 %v1571, 1.0
        %v1596 = vadd.f32 %v1572, 1.0
        %v1597 = vadd.f32 %v1573, 1.0
        %v1598 = vadd.f32 %v1574, 1.0
        %v1599 = vadd.f32 %v1575, 1.0
        %v1600 = vadd.f32 %v1576, 1.0
        %v1601 = vadd.f32 %v1577, 1.0
        %v1602 = vadd.f32 %v1578, 1.0
        %v1603 = vadd.f32 %v1579, 1.0
        %v1604 = vadd.f32 %v1580, 1.0
        %v1605 = vadd.f32 %v1581, 1.0
        %v1606 = vadd.f32 %v1582, 1.0
        %v1607 = vadd.f32 %v1583, 1.0
        %v1608 = vadd.f32 %v1584, 1.0
        %v1609 = vadd.f32 %v1585, 1.0
        %v1610 = vadd.f32 %v1586, 1.0
        %v1611 = vadd.f32 %v1587, 1.0
        %v1612 = vadd.f32 %v1588, 1.0
        %v1613 = vadd.f32 %v1589, 1.0
        %v1614 = vadd.f32 %v1590, 1.0
        %v1615 = vadd.f32 %v1591, 1.0
        %v1616 = vmul.f32 %v1520, %v1592
        %v1617 = vmul.f32 %v1521, %v1593
        %v1618 = vmul.f32 %v1522, %v1594
        %v1619 = vmul.f32 %v1523, %v1595
        %v1620 = vmul.f32 %v1524, %v1596
        %v1621 = vmul.f32 %v1525, %v1597
        %v1622 = vmul.f32 %v1526, %v1598
        %v1623 = vmul.f32 %v1527, %v1599
        %v1624 = vmul.f32 %v1528, %v1600
        %v1625 = vmul.f32 %v1529, %v1601
        %v1626 = vmul.f32 %v1530, %v1602
        %v1627 = vmul.f32 %v1531, %v1603
        %v1628 = vmul.f32 %v1532, %v1604
        %v1629 = vmul.f32 %v1533, %v1605
        %v1630 = vmul.f32 %v1534, %v1606
        %v1631 = vmul.f32 %v1535, %v1607
        %v1632 = vmul.f32 %v1536, %v1608
        %v1633 = vmul.f32 %v1537, %v1609
        %v1634 = vmul.f32 %v1538, %v1610
        %v1635 = vmul.f32 %v1539, %v1611
        %v1636 = vmul.f32 %v1540, %v1612
        %v1637 = vmul.f32 %v1541, %v1613
        %v1638 = vmul.f32 %v1542, %v1614
        %v1639 = vmul.f32 %v1543, %v1615
        %v1640 = vrot.slane %v1616, 7
        %v1641 = vrot.slane %v1617, 7
        %v1642 = vrot.slane %v1618, 7
        %v1643 = vrot.slane %v1619, 7
        %v1644 = vrot.slane %v1620, 7
        %v1645 = vrot.slane %v1621, 7
        %v1646 = vrot.slane %v1622, 7
        %v1647 = vrot.slane %v1623, 7
        %v1648 = vrot.slane %v1624, 7
        %v1649 = vrot.slane %v1625, 7
        %v1650 = vrot.slane %v1626, 7
        %v1651 = vrot.slane %v1627, 7
        %v1652 = vrot.slane %v1628, 7
        %v1653 = vrot.slane %v1629, 7
        %v1654 = vrot.slane %v1630, 7
        %v1655 = vrot.slane %v1631, 7
        %v1656 = vrot.slane %v1632, 7
        %v1657 = vrot.slane %v1633, 7
        %v1658 = vrot.slane %v1634, 7
        %v1659 = vrot.slane %v1635, 7
        %v1660 = vrot.slane %v1636, 7
        %v1661 = vrot.slane %v1637, 7
        %v1662 = vrot.slane %v1638, 7
        %v1663 = vrot.slane %v1639, 7
        %v1664 = vsel %vm819, %v1662, %v1663
        %v1665 = vsel %vm819, %v1661, %v1662
        %v1666 = vsel %vm819, %v1660, %v1661
        %v1667 = vsel %vm819, %v1659, %v1660
        %v1668 = vsel %vm819, %v1658, %v1659
        %v1669 = vsel %vm819, %v1657, %v1658
        %v1670 = vsel %vm819, %v1656, %v1657
        %v1671 = vsel %vm819, %v1655, %v1656
        %v1672 = vsel %vm819, %v1654, %v1655
        %v1673 = vsel %vm819, %v1653, %v1654
        %v1674 = vsel %vm819, %v1652, %v1653
        %v1675 = vsel %vm819, %v1651, %v1652
        %v1676 = vsel %vm819, %v1650, %v1651
        %v1677 = vsel %vm819, %v1649, %v1650
        %v1678 = vsel %vm819, %v1648, %v1649
        %v1679 = vsel %vm819, %v1647, %v1648
        %v1680 = vsel %vm819, %v1646, %v1647
        %v1681 = vsel %vm819, %v1645, %v1646
        %v1682 = vsel %vm819, %v1644, %v1645
        %v1683 = vsel %vm819, %v1643, %v1644
        %v1684 = vsel %vm819, %v1642, %v1643
        %v1685 = vsel %vm819, %v1641, %v1642
        %v1686 = vsel %vm819, %v1640, %v1641
        %v1687 = vsel %vm819, %v1663, %v1640
        %v1688 = vsel %vm771, 0.0, %v1687
        %v1689 = vsel %vm772, 0.0, %v1686
        %v1690 = vsel %vm773, 0.0, %v1685
        %v1691 = vsel %vm774, 0.0, %v1684
        %v1692 = vsel %vm775, 0.0, %v1683
        %v1693 = vsel %vm776, 0.0, %v1682
        %v1694 = vsel %vm777, 0.0, %v1681
        %v1695 = vsel %vm778, 0.0, %v1680
        %v1696 = vsel %vm779, 0.0, %v1679
        %v1697 = vsel %vm780, 0.0, %v1678
        %v1698 = vsel %vm781, 0.0, %v1677
        %v1699 = vsel %vm782, 0.0, %v1676
        %v1700 = vsel %vm783, 0.0, %v1675
        %v1701 = vsel %vm784, 0.0, %v1674
        %v1702 = vsel %vm785, 0.0, %v1673
        %v1703 = vsel %vm786, 0.0, %v1672
        %v1704 = vsel %vm787, 0.0, %v1671
        %v1705 = vsel %vm788, 0.0, %v1670
        %v1706 = vsel %vm789, 0.0, %v1669
        %v1707 = vsel %vm790, 0.0, %v1668
        %v1708 = vsel %vm791, 0.0, %v1667
        %v1709 = vsel %vm792, 0.0, %v1666
        %v1710 = vsel %vm793, 0.0, %v1665
        %v1711 = vsel %vm794, 0.0, %v1664
        %v1712 = vrot.slane %v1616, 1
        %v1713 = vrot.slane %v1617, 1
        %v1714 = vrot.slane %v1618, 1
        %v1715 = vrot.slane %v1619, 1
        %v1716 = vrot.slane %v1620, 1
        %v1717 = vrot.slane %v1621, 1
        %v1718 = vrot.slane %v1622, 1
        %v1719 = vrot.slane %v1623, 1
        %v1720 = vrot.slane %v1624, 1
        %v1721 = vrot.slane %v1625, 1
        %v1722 = vrot.slane %v1626, 1
        %v1723 = vrot.slane %v1627, 1
        %v1724 = vrot.slane %v1628, 1
        %v1725 = vrot.slane %v1629, 1
        %v1726 = vrot.slane %v1630, 1
        %v1727 = vrot.slane %v1631, 1
        %v1728 = vrot.slane %v1632, 1
        %v1729 = vrot.slane %v1633, 1
        %v1730 = vrot.slane %v1634, 1
        %v1731 = vrot.slane %v1635, 1
        %v1732 = vrot.slane %v1636, 1
        %v1733 = vrot.slane %v1637, 1
        %v1734 = vrot.slane %v1638, 1
        %v1735 = vrot.slane %v1639, 1
        %v1736 = vsel %vm916, %v1734, %v1735
        %v1737 = vsel %vm916, %v1733, %v1734
        %v1738 = vsel %vm916, %v1732, %v1733
        %v1739 = vsel %vm916, %v1731, %v1732
        %v1740 = vsel %vm916, %v1730, %v1731
        %v1741 = vsel %vm916, %v1729, %v1730
        %v1742 = vsel %vm916, %v1728, %v1729
        %v1743 = vsel %vm916, %v1727, %v1728
        %v1744 = vsel %vm916, %v1726, %v1727
        %v1745 = vsel %vm916, %v1725, %v1726
        %v1746 = vsel %vm916, %v1724, %v1725
        %v1747 = vsel %vm916, %v1723, %v1724
        %v1748 = vsel %vm916, %v1722, %v1723
        %v1749 = vsel %vm916, %v1721, %v1722
        %v1750 = vsel %vm916, %v1720, %v1721
        %v1751 = vsel %vm916, %v1719, %v1720
        %v1752 = vsel %vm916, %v1718, %v1719
        %v1753 = vsel %vm916, %v1717, %v1718
        %v1754 = vsel %vm916, %v1716, %v1717
        %v1755 = vsel %vm916, %v1715, %v1716
        %v1756 = vsel %vm916, %v1714, %v1715
        %v1757 = vsel %vm916, %v1713, %v1714
        %v1758 = vsel %vm916, %v1712, %v1713
        %v1759 = vsel %vm916, %v1735, %v1712
        %v1760 = vsel %vm868, 0.0, %v1758
        %v1761 = vsel %vm869, 0.0, %v1757
        %v1762 = vsel %vm870, 0.0, %v1756
        %v1763 = vsel %vm871, 0.0, %v1755
        %v1764 = vsel %vm872, 0.0, %v1754
        %v1765 = vsel %vm873, 0.0, %v1753
        %v1766 = vsel %vm874, 0.0, %v1752
        %v1767 = vsel %vm875, 0.0, %v1751
        %v1768 = vsel %vm876, 0.0, %v1750
        %v1769 = vsel %vm877, 0.0, %v1749
        %v1770 = vsel %vm878, 0.0, %v1748
        %v1771 = vsel %vm879, 0.0, %v1747
        %v1772 = vsel %vm880, 0.0, %v1746
        %v1773 = vsel %vm881, 0.0, %v1745
        %v1774 = vsel %vm882, 0.0, %v1744
        %v1775 = vsel %vm883, 0.0, %v1743
        %v1776 = vsel %vm884, 0.0, %v1742
        %v1777 = vsel %vm885, 0.0, %v1741
        %v1778 = vsel %vm886, 0.0, %v1740
        %v1779 = vsel %vm887, 0.0, %v1739
        %v1780 = vsel %vm888, 0.0, %v1738
        %v1781 = vsel %vm889, 0.0, %v1737
        %v1782 = vsel %vm890, 0.0, %v1736
        %v1783 = vsel %vm891, 0.0, %v1759
        %v1784 = vpack.c.bf16 %v1689, %v1688
        %v1785 = vpack.c.bf16 %v1617, %v1616
        %v1786 = vpack.c.bf16 %v1761, %v1760
        %v1787 = vpack.c.bf16 %v1691, %v1690
        %v1788 = vpack.c.bf16 %v1619, %v1618
        %v1789 = vpack.c.bf16 %v1763, %v1762
        %v1790 = vpack.c.bf16 %v1693, %v1692
        %v1791 = vpack.c.bf16 %v1621, %v1620
        %v1792 = vpack.c.bf16 %v1765, %v1764
        %v1793 = vpack.c.bf16 %v1695, %v1694
        %v1794 = vpack.c.bf16 %v1623, %v1622
        %v1795 = vpack.c.bf16 %v1767, %v1766
        %v1796 = vpack.c.bf16 %v1697, %v1696
        %v1797 = vpack.c.bf16 %v1625, %v1624
        %v1798 = vpack.c.bf16 %v1769, %v1768
        %v1799 = vpack.c.bf16 %v1699, %v1698
        %v1800 = vpack.c.bf16 %v1627, %v1626
        %v1801 = vpack.c.bf16 %v1771, %v1770
        %v1802 = vpack.c.bf16 %v1701, %v1700
        %v1803 = vpack.c.bf16 %v1629, %v1628
        %v1804 = vpack.c.bf16 %v1773, %v1772
        %v1805 = vpack.c.bf16 %v1703, %v1702
        %v1806 = vpack.c.bf16 %v1631, %v1630
        %v1807 = vpack.c.bf16 %v1775, %v1774
        %v1808 = vpack.c.bf16 %v1705, %v1704
        %v1809 = vpack.c.bf16 %v1633, %v1632
        %v1810 = vpack.c.bf16 %v1777, %v1776
        %v1811 = vpack.c.bf16 %v1707, %v1706
        %v1812 = vpack.c.bf16 %v1635, %v1634
        %v1813 = vpack.c.bf16 %v1779, %v1778
        %v1814 = vpack.c.bf16 %v1709, %v1708
        %v1815 = vpack.c.bf16 %v1637, %v1636
        %v1816 = vpack.c.bf16 %v1781, %v1780
        %v1817 = vpack.c.bf16 %v1711, %v1710
        %v1818 = vpack.c.bf16 %v1639, %v1638
        %v1819 = vpack.c.bf16 %v1783, %v1782
        %v1820 = vld [vmem:[%s5] sm:$0xf]
        %v1821 = vld [vmem:[%s5 + $0x4] sm:$0xf]
        %v1822 = vld [vmem:[%s5 + $0x8] sm:$0xf]
        %v1823 = vld [vmem:[%s5 + $0xc] sm:$0xf]
        %v1824 = vld [vmem:[%s5 + $0x10] sm:$0xf]
        %v1825 = vld [vmem:[%s5 + $0x14] sm:$0xf]
        %v1826 = vld [vmem:[%s5 + $0x18] sm:$0xf]
        %v1827 = vld [vmem:[%s5 + $0x1c] sm:$0xf]
        %v1828 = vld [vmem:[%s5 + $0x20] sm:$0xf]
        %v1829 = vld [vmem:[%s5 + $0x24] sm:$0xf]
        %v1830 = vld [vmem:[%s5 + $0x28] sm:$0xf]
        %v1831 = vld [vmem:[%s5 + $0x2c] sm:$0xf]
        %v1832 = vld [vmem:[%s5 + $0x30] sm:$0xf]
        %v1833 = vld [vmem:[%s5 + $0x34] sm:$0xf]
        %v1834 = vld [vmem:[%s5 + $0x38] sm:$0xf]
        %v1835 = vld [vmem:[%s5 + $0x3c] sm:$0xf]
        %v1836 = vld [vmem:[%s5 + $0x40] sm:$0xf]
        %v1837 = vld [vmem:[%s5 + $0x44] sm:$0xf]
        %v1838 = vld [vmem:[%s5 + $0x48] sm:$0xf]
        %v1839 = vld [vmem:[%s5 + $0x4c] sm:$0xf]
        %v1840 = vld [vmem:[%s5 + $0x50] sm:$0xf]
        %v1841 = vld [vmem:[%s5 + $0x54] sm:$0xf]
        %v1842 = vld [vmem:[%s5 + $0x58] sm:$0xf]
        %v1843 = vld [vmem:[%s5 + $0x5c] sm:$0xf]
        %v1844 = vld [vmem:[%s5 + $0x60] sm:$0xf]
        %v1845 = vld [vmem:[%s5 + $0x64] sm:$0xf]
        %v1846 = vld [vmem:[%s5 + $0x68] sm:$0xf]
        %v1847 = vld [vmem:[%s5 + $0x6c] sm:$0xf]
        %v1848 = vld [vmem:[%s5 + $0x70] sm:$0xf]
        %v1849 = vld [vmem:[%s5 + $0x74] sm:$0xf]
        %v1850 = vld [vmem:[%s5 + $0x78] sm:$0xf]
        %v1851 = vld [vmem:[%s5 + $0x7c] sm:$0xf]
        %v1852 = vld [vmem:[%s5 + $0x80] sm:$0xf]
        %v1853 = vld [vmem:[%s5 + $0x84] sm:$0xf]
        %v1854 = vld [vmem:[%s5 + $0x88] sm:$0xf]
        %v1855 = vld [vmem:[%s5 + $0x8c] sm:$0xf]
        %v1856 = vld [vmem:[%s5 + $0x90] sm:$0xf]
        %v1857 = vld [vmem:[%s5 + $0x94] sm:$0xf]
        %v1858 = vld [vmem:[%s5 + $0x98] sm:$0xf]
        %v1859 = vld [vmem:[%s5 + $0x9c] sm:$0xf]
        %v1860 = vld [vmem:[%s5 + $0xa0] sm:$0xf]
        %v1861 = vld [vmem:[%s5 + $0xa4] sm:$0xf]
        %v1862 = vld [vmem:[%s5 + $0xa8] sm:$0xf]
        %v1863 = vld [vmem:[%s5 + $0xac] sm:$0xf]
        %v1864 = vld [vmem:[%s5 + $0xb0] sm:$0xf]
        %v1865 = vld [vmem:[%s5 + $0xb4] sm:$0xf]
        %v1866 = vld [vmem:[%s5 + $0xb8] sm:$0xf]
        %v1867 = vld [vmem:[%s5 + $0xbc] sm:$0xf]
        %v1868 = vld [vmem:[%s6] sm:$0x1]
        %v1870 = vlaneseq
        %v1871 = vshrl.u32 %v1870, 7
        %v1872 = vsub.s32 0, %v1871
        %v1873 = vrot.slane %v1868, %v1872
        %v1923 = vunpack.c.l.b16 %v1820
        %v1924 = vunpack.c.l.b16 %v1821
        %v1925 = vunpack.c.l.b16 %v1822
        %v1926 = vunpack.c.l.b16 %v1823
        %v1927 = vunpack.c.l.b16 %v1824
        %v1928 = vunpack.c.l.b16 %v1825
        %v1929 = vunpack.c.l.b16 %v1826
        %v1930 = vunpack.c.l.b16 %v1827
        %v1931 = vunpack.c.l.b16 %v1828
        %v1932 = vunpack.c.l.b16 %v1829
        %v1933 = vunpack.c.l.b16 %v1830
        %v1934 = vunpack.c.l.b16 %v1831
        %v1935 = vunpack.c.l.b16 %v1832
        %v1936 = vunpack.c.l.b16 %v1833
        %v1937 = vunpack.c.l.b16 %v1834
        %v1938 = vunpack.c.l.b16 %v1835
        %v1939 = vunpack.c.l.b16 %v1836
        %v1940 = vunpack.c.l.b16 %v1837
        %v1941 = vunpack.c.l.b16 %v1838
        %v1942 = vunpack.c.l.b16 %v1839
        %v1943 = vunpack.c.l.b16 %v1840
        %v1944 = vunpack.c.l.b16 %v1841
        %v1945 = vunpack.c.l.b16 %v1842
        %v1946 = vunpack.c.l.b16 %v1843
        %v1947 = vunpack.c.l.b16 %v1844
        %v1948 = vunpack.c.l.b16 %v1845
        %v1949 = vunpack.c.l.b16 %v1846
        %v1950 = vunpack.c.l.b16 %v1847
        %v1951 = vunpack.c.l.b16 %v1848
        %v1952 = vunpack.c.l.b16 %v1849
        %v1953 = vunpack.c.l.b16 %v1850
        %v1954 = vunpack.c.l.b16 %v1851
        %v1955 = vunpack.c.l.b16 %v1852
        %v1956 = vunpack.c.l.b16 %v1853
        %v1957 = vunpack.c.l.b16 %v1854
        %v1958 = vunpack.c.l.b16 %v1855
        %v1959 = vunpack.c.l.b16 %v1856
        %v1960 = vunpack.c.l.b16 %v1857
        %v1961 = vunpack.c.l.b16 %v1858
        %v1962 = vunpack.c.l.b16 %v1859
        %v1963 = vunpack.c.l.b16 %v1860
        %v1964 = vunpack.c.l.b16 %v1861
        %v1965 = vunpack.c.l.b16 %v1862
        %v1966 = vunpack.c.l.b16 %v1863
        %v1967 = vunpack.c.l.b16 %v1864
        %v1968 = vunpack.c.l.b16 %v1865
        %v1969 = vunpack.c.l.b16 %v1866
        %v1970 = vunpack.c.l.b16 %v1867
        %v1971 = vpack.c.b16 %v1924, %v1923
        %v1972 = vpack.c.b16 %v1926, %v1925
        %v1973 = vpack.c.b16 %v1928, %v1927
        %v1974 = vpack.c.b16 %v1930, %v1929
        %v1975 = vpack.c.b16 %v1932, %v1931
        %v1976 = vpack.c.b16 %v1934, %v1933
        %v1977 = vpack.c.b16 %v1936, %v1935
        %v1978 = vpack.c.b16 %v1938, %v1937
        %v1979 = vpack.c.b16 %v1940, %v1939
        %v1980 = vpack.c.b16 %v1942, %v1941
        %v1981 = vpack.c.b16 %v1944, %v1943
        %v1982 = vpack.c.b16 %v1946, %v1945
        %v1983 = vpack.c.b16 %v1948, %v1947
        %v1984 = vpack.c.b16 %v1950, %v1949
        %v1985 = vpack.c.b16 %v1952, %v1951
        %v1986 = vpack.c.b16 %v1954, %v1953
        %v1987 = vpack.c.b16 %v1956, %v1955
        %v1988 = vpack.c.b16 %v1958, %v1957
        %v1989 = vpack.c.b16 %v1960, %v1959
        %v1990 = vpack.c.b16 %v1962, %v1961
        %v1991 = vpack.c.b16 %v1964, %v1963
        %v1992 = vpack.c.b16 %v1966, %v1965
        %v1993 = vpack.c.b16 %v1968, %v1967
        %v1994 = vpack.c.b16 %v1970, %v1969
        %2019 = vmatprep.subr.bf16.mxu0 0
        %2020 = vmatpush1.bf16.msra.mxu0 %v1971
        %2021 = vmatprep.subr.bf16.mxu0 0
        %2022 = vmatpush1.bf16.msra.mxu0 %v1972
        %2023 = vmatprep.subr.bf16.mxu0 0
        %2024 = vmatpush1.bf16.msra.mxu0 %v1973
        %2025 = vmatprep.subr.bf16.mxu0 0
        %2026 = vmatpush1.bf16.msra.mxu0 %v1974
        %2027 = vmatprep.subr.bf16.mxu0 0
        %2028 = vmatpush1.bf16.msra.mxu0 %v1975
        %2029 = vmatprep.subr.bf16.mxu0 0
        %2030 = vmatpush1.bf16.msra.mxu0 %v1976
        %2031 = vmatprep.subr.bf16.mxu0 0
        %2032 = vmatpush1.bf16.msra.mxu0 %v1977
        %2033 = vmatprep.subr.bf16.mxu0 0
        %2034 = vmatpush1.bf16.msra.mxu0 %v1978
        %2035 = vmatprep.subr.bf16.mxu0 0
        %2036 = vmatpush1.bf16.msra.mxu0 %v1979
        %2037 = vmatprep.subr.bf16.mxu0 0
        %2038 = vmatpush1.bf16.msra.mxu0 %v1980
        %2039 = vmatprep.subr.bf16.mxu0 0
        %2040 = vmatpush1.bf16.msra.mxu0 %v1981
        %2041 = vmatprep.subr.bf16.mxu0 0
        %2042 = vmatpush1.bf16.msra.mxu0 %v1982
        %2043 = vmatprep.subr.bf16.mxu0 0
        %2044 = vmatpush1.bf16.msra.mxu0 %v1983
        %2045 = vmatprep.subr.bf16.mxu0 0
        %2046 = vmatpush1.bf16.msra.mxu0 %v1984
        %2047 = vmatprep.subr.bf16.mxu0 0
        %2048 = vmatpush1.bf16.msra.mxu0 %v1985
        %2049 = vmatprep.subr.bf16.mxu0 0
        %2050 = vmatpush1.bf16.msra.mxu0 %v1986
        %2051 = vmatprep.mubr.bf16.mxu0 %v1785
        %2052 = vmatmul.mubr.bf16.gmra.mrb[0].mxu0 %v1784
        %v2053 = vpop.f32.mrb[0].mxu0
        %v2054 = vadd.f32 %v1873, %v2053
        %v2055 = vpop.f32.mrb[0].mxu0
        %v2056 = vpop.f32.mrb[0].mxu0
        %v2057 = vadd.f32 %v1873, %v2056
        %v2058 = vpop.f32.mrb[0].mxu0
        %2059 = vmatprep.mubr.bf16.mxu0 %v1788
        %2060 = vmatmul.mubr.bf16.gmra.mrb[0].mxu0 %v1787
        %v2061 = vpop.f32.mrb[0].mxu0
        %v2062 = vadd.f32 %v1873, %v2061
        %v2063 = vpop.f32.mrb[0].mxu0
        %v2064 = vpop.f32.mrb[0].mxu0
        %v2065 = vadd.f32 %v1873, %v2064
        %v2066 = vpop.f32.mrb[0].mxu0
        %2067 = vmatprep.mubr.bf16.mxu0 %v1791
        %2068 = vmatmul.mubr.bf16.gmra.mrb[0].mxu0 %v1790
        %v2069 = vpop.f32.mrb[0].mxu0
        %v2070 = vadd.f32 %v1873, %v2069
        %v2071 = vpop.f32.mrb[0].mxu0
        %v2072 = vpop.f32.mrb[0].mxu0
        %v2073 = vadd.f32 %v1873, %v2072
        %v2074 = vpop.f32.mrb[0].mxu0
        %2075 = vmatprep.mubr.bf16.mxu0 %v1794
        %2076 = vmatmul.mubr.bf16.gmra.mrb[0].mxu0 %v1793
        %v2077 = vpop.f32.mrb[0].mxu0
        %v2078 = vadd.f32 %v1873, %v2077
        %v2079 = vpop.f32.mrb[0].mxu0
        %v2080 = vpop.f32.mrb[0].mxu0
        %v2081 = vadd.f32 %v1873, %v2080
        %v2082 = vpop.f32.mrb[0].mxu0
        %2083 = vmatprep.mubr.bf16.mxu0 %v1797
        %2084 = vmatmul.mubr.bf16.gmra.mrb[0].mxu0 %v1796
        %v2085 = vpop.f32.mrb[0].mxu0
        %v2086 = vadd.f32 %v1873, %v2085
        %v2087 = vpop.f32.mrb[0].mxu0
        %v2088 = vpop.f32.mrb[0].mxu0
        %v2089 = vadd.f32 %v1873, %v2088
        %v2090 = vpop.f32.mrb[0].mxu0
        %2091 = vmatprep.mubr.bf16.mxu0 %v1800
        %2092 = vmatmul.mubr.bf16.gmra.mrb[0].mxu0 %v1799
        %v2093 = vpop.f32.mrb[0].mxu0
        %v2094 = vadd.f32 %v1873, %v2093
        %v2095 = vpop.f32.mrb[0].mxu0
        %v2096 = vpop.f32.mrb[0].mxu0
        %v2097 = vadd.f32 %v1873, %v2096
        %v2098 = vpop.f32.mrb[0].mxu0
        %2099 = vmatprep.mubr.bf16.mxu0 %v1803
        %2100 = vmatmul.mubr.bf16.gmra.mrb[0].mxu0 %v1802
        %v2101 = vpop.f32.mrb[0].mxu0
        %v2102 = vadd.f32 %v1873, %v2101
        %v2103 = vpop.f32.mrb[0].mxu0
        %v2104 = vpop.f32.mrb[0].mxu0
        %v2105 = vadd.f32 %v1873, %v2104
        %v2106 = vpop.f32.mrb[0].mxu0
        %2107 = vmatprep.mubr.bf16.mxu0 %v1806
        %2108 = vmatmul.mubr.bf16.gmra.mrb[0].mxu0 %v1805
        %v2109 = vpop.f32.mrb[0].mxu0
        %v2110 = vadd.f32 %v1873, %v2109
        %v2111 = vpop.f32.mrb[0].mxu0
        %v2112 = vpop.f32.mrb[0].mxu0
        %v2113 = vadd.f32 %v1873, %v2112
        %v2114 = vpop.f32.mrb[0].mxu0
        %2115 = vmatprep.mubr.bf16.mxu0 %v1809
        %2116 = vmatmul.mubr.bf16.gmra.mrb[0].mxu0 %v1808
        %v2117 = vpop.f32.mrb[0].mxu0
        %v2118 = vadd.f32 %v1873, %v2117
        %v2119 = vpop.f32.mrb[0].mxu0
        %v2120 = vpop.f32.mrb[0].mxu0
        %v2121 = vadd.f32 %v1873, %v2120
        %v2122 = vpop.f32.mrb[0].mxu0
        %2123 = vmatprep.mubr.bf16.mxu0 %v1812
        %2124 = vmatmul.mubr.bf16.gmra.mrb[0].mxu0 %v1811
        %v2125 = vpop.f32.mrb[0].mxu0
        %v2126 = vadd.f32 %v1873, %v2125
        %v2127 = vpop.f32.mrb[0].mxu0
        %v2128 = vpop.f32.mrb[0].mxu0
        %v2129 = vadd.f32 %v1873, %v2128
        %v2130 = vpop.f32.mrb[0].mxu0
        %2131 = vmatprep.mubr.bf16.mxu0 %v1815
        %2132 = vmatmul.mubr.bf16.gmra.mrb[0].mxu0 %v1814
        %v2133 = vpop.f32.mrb[0].mxu0
        %v2134 = vadd.f32 %v1873, %v2133
        %v2135 = vpop.f32.mrb[0].mxu0
        %v2136 = vpop.f32.mrb[0].mxu0
        %v2137 = vadd.f32 %v1873, %v2136
        %v2138 = vpop.f32.mrb[0].mxu0
        %2139 = vmatprep.mubr.bf16.mxu0 %v1818
        %2140 = vmatmul.mubr.bf16.gmra.mrb[0].mxu0 %v1817
        %v2141 = vpop.f32.mrb[0].mxu0
        %v2142 = vadd.f32 %v1873, %v2141
        %v2143 = vpop.f32.mrb[0].mxu0
        %v2144 = vpop.f32.mrb[0].mxu0
        %v2145 = vadd.f32 %v1873, %v2144
        %v2146 = vpop.f32.mrb[0].mxu0
        %2147 = vdwg.mxu0
        %2148 = vmatprep.subr.bf16.mxu0 0
        %2149 = vmatpush1.bf16.msra.mxu0 %v1987
        %2150 = vmatprep.subr.bf16.mxu0 0
        %2151 = vmatpush1.bf16.msra.mxu0 %v1988
        %2152 = vmatprep.subr.bf16.mxu0 0
        %2153 = vmatpush1.bf16.msra.mxu0 %v1989
        %2154 = vmatprep.subr.bf16.mxu0 0
        %2155 = vmatpush1.bf16.msra.mxu0 %v1990
        %2156 = vmatprep.subr.bf16.mxu0 0
        %2157 = vmatpush1.bf16.msra.mxu0 %v1991
        %2158 = vmatprep.subr.bf16.mxu0 0
        %2159 = vmatpush1.bf16.msra.mxu0 %v1992
        %2160 = vmatprep.subr.bf16.mxu0 0
        %2161 = vmatpush1.bf16.msra.mxu0 %v1993
        %2162 = vmatprep.subr.bf16.mxu0 0
        %2163 = vmatpush1.bf16.msra.mxu0 %v1994
        %2164 = vmatprep.subr.bf16.mxu0 0
        %2165 = vmatpush1.bf16.msra.mxu0 0
        %2166 = vmatprep.subr.bf16.mxu0 0
        %2167 = vmatpush1.bf16.msra.mxu0 0
        %2168 = vmatprep.subr.bf16.mxu0 0
        %2169 = vmatpush1.bf16.msra.mxu0 0
        %2170 = vmatprep.subr.bf16.mxu0 0
        %2171 = vmatpush1.bf16.msra.mxu0 0
        %2172 = vmatprep.subr.bf16.mxu0 0
        %2173 = vmatpush1.bf16.msra.mxu0 0
        %2174 = vmatprep.subr.bf16.mxu0 0
        %2175 = vmatpush1.bf16.msra.mxu0 0
        %2176 = vmatprep.subr.bf16.mxu0 0
        %2177 = vmatpush1.bf16.msra.mxu0 0
        %2178 = vmatprep.subr.bf16.mxu0 0
        %2179 = vmatpush1.bf16.msra.mxu0 0
        %2180 = vmatprep.mubr.bf16.mxu0 0
        %2181 = vmatmul.mubr.bf16.gmra.mrb[0].mxu0 %v1786
        %v2182 = vpop.f32.mrb[0].mxu0
        %v2183 = vadd.f32 %v2054, %v2182
        %v2184 = vpop.f32.mrb[0].mxu0
        %v2185 = vpop.f32.mrb[0].mxu0
        %v2186 = vadd.f32 %v2057, %v2185
        %v2187 = vpop.f32.mrb[0].mxu0
        %2188 = vmatprep.mubr.bf16.mxu0 0
        %2189 = vmatmul.mubr.bf16.gmra.mrb[0].mxu0 %v1789
        %v2190 = vpop.f32.mrb[0].mxu0
        %v2191 = vadd.f32 %v2062, %v2190
        %v2192 = vpop.f32.mrb[0].mxu0
        %v2193 = vpop.f32.mrb[0].mxu0
        %v2194 = vadd.f32 %v2065, %v2193
        %v2195 = vpop.f32.mrb[0].mxu0
        %2196 = vmatprep.mubr.bf16.mxu0 0
        %2197 = vmatmul.mubr.bf16.gmra.mrb[0].mxu0 %v1792
        %v2198 = vpop.f32.mrb[0].mxu0
        %v2199 = vadd.f32 %v2070, %v2198
        %v2200 = vpop.f32.mrb[0].mxu0
        %v2201 = vpop.f32.mrb[0].mxu0
        %v2202 = vadd.f32 %v2073, %v2201
        %v2203 = vpop.f32.mrb[0].mxu0
        %2204 = vmatprep.mubr.bf16.mxu0 0
        %2205 = vmatmul.mubr.bf16.gmra.mrb[0].mxu0 %v1795
        %v2206 = vpop.f32.mrb[0].mxu0
        %v2207 = vadd.f32 %v2078, %v2206
        %v2208 = vpop.f32.mrb[0].mxu0
        %v2209 = vpop.f32.mrb[0].mxu0
        %v2210 = vadd.f32 %v2081, %v2209
        %v2211 = vpop.f32.mrb[0].mxu0
        %2212 = vmatprep.mubr.bf16.mxu0 0
        %2213 = vmatmul.mubr.bf16.gmra.mrb[0].mxu0 %v1798
        %v2214 = vpop.f32.mrb[0].mxu0
        %v2215 = vadd.f32 %v2086, %v2214
        %v2216 = vpop.f32.mrb[0].mxu0
        %v2217 = vpop.f32.mrb[0].mxu0
        %v2218 = vadd.f32 %v2089, %v2217
        %v2219 = vpop.f32.mrb[0].mxu0
        %2220 = vmatprep.mubr.bf16.mxu0 0
        %2221 = vmatmul.mubr.bf16.gmra.mrb[0].mxu0 %v1801
        %v2222 = vpop.f32.mrb[0].mxu0
        %v2223 = vadd.f32 %v2094, %v2222
        %v2224 = vpop.f32.mrb[0].mxu0
        %v2225 = vpop.f32.mrb[0].mxu0
        %v2226 = vadd.f32 %v2097, %v2225
        %v2227 = vpop.f32.mrb[0].mxu0
        %2228 = vmatprep.mubr.bf16.mxu0 0
        %2229 = vmatmul.mubr.bf16.gmra.mrb[0].mxu0 %v1804
        %v2230 = vpop.f32.mrb[0].mxu0
        %v2231 = vadd.f32 %v2102, %v2230
        %v2232 = vpop.f32.mrb[0].mxu0
        %v2233 = vpop.f32.mrb[0].mxu0
        %v2234 = vadd.f32 %v2105, %v2233
        %v2235 = vpop.f32.mrb[0].mxu0
        %2236 = vmatprep.mubr.bf16.mxu0 0
        %2237 = vmatmul.mubr.bf16.gmra.mrb[0].mxu0 %v1807
        %v2238 = vpop.f32.mrb[0].mxu0
        %v2239 = vadd.f32 %v2110, %v2238
        %v2240 = vpop.f32.mrb[0].mxu0
        %v2241 = vpop.f32.mrb[0].mxu0
        %v2242 = vadd.f32 %v2113, %v2241
        %v2243 = vpop.f32.mrb[0].mxu0
        %2244 = vmatprep.mubr.bf16.mxu0 0
        %2245 = vmatmul.mubr.bf16.gmra.mrb[0].mxu0 %v1810
        %v2246 = vpop.f32.mrb[0].mxu0
        %v2247 = vadd.f32 %v2118, %v2246
        %v2248 = vpop.f32.mrb[0].mxu0
        %v2249 = vpop.f32.mrb[0].mxu0
        %v2250 = vadd.f32 %v2121, %v2249
        %v2251 = vpop.f32.mrb[0].mxu0
        %2252 = vmatprep.mubr.bf16.mxu0 0
        %2253 = vmatmul.mubr.bf16.gmra.mrb[0].mxu0 %v1813
        %v2254 = vpop.f32.mrb[0].mxu0
        %v2255 = vadd.f32 %v2126, %v2254
        %v2256 = vpop.f32.mrb[0].mxu0
        %v2257 = vpop.f32.mrb[0].mxu0
        %v2258 = vadd.f32 %v2129, %v2257
        %v2259 = vpop.f32.mrb[0].mxu0
        %2260 = vmatprep.mubr.bf16.mxu0 0
        %2261 = vmatmul.mubr.bf16.gmra.mrb[0].mxu0 %v1816
        %v2262 = vpop.f32.mrb[0].mxu0
        %v2263 = vadd.f32 %v2134, %v2262
        %v2264 = vpop.f32.mrb[0].mxu0
        %v2265 = vpop.f32.mrb[0].mxu0
        %v2266 = vadd.f32 %v2137, %v2265
        %v2267 = vpop.f32.mrb[0].mxu0
        %2268 = vmatprep.mubr.bf16.mxu0 0
        %2269 = vmatmul.mubr.bf16.gmra.mrb[0].mxu0 %v1819
        %v2270 = vpop.f32.mrb[0].mxu0
        %v2271 = vadd.f32 %v2142, %v2270
        %v2272 = vpop.f32.mrb[0].mxu0
        %v2273 = vpop.f32.mrb[0].mxu0
        %v2274 = vadd.f32 %v2145, %v2273
        %v2275 = vpop.f32.mrb[0].mxu0
        %2276 = vdwg.mxu0
        %v2277 = vld [vmem:[%s7] sm:$0x1]
        %v2279 = vlaneseq
        %v2280 = vshrl.u32 %v2279, 7
        %v2281 = vsub.s32 0, %v2280
        %v2282 = vrot.slane %v2277, %v2281
        %v2284 = vmul.f32 %v2183, %v2282
        %v2285 = vmul.f32 %v2186, %v2282
        %v2286 = vmul.f32 %v2191, %v2282
        %v2287 = vmul.f32 %v2194, %v2282
        %v2288 = vmul.f32 %v2199, %v2282
        %v2289 = vmul.f32 %v2202, %v2282
        %v2290 = vmul.f32 %v2207, %v2282
        %v2291 = vmul.f32 %v2210, %v2282
        %v2292 = vmul.f32 %v2215, %v2282
        %v2293 = vmul.f32 %v2218, %v2282
        %v2294 = vmul.f32 %v2223, %v2282
        %v2295 = vmul.f32 %v2226, %v2282
        %v2296 = vmul.f32 %v2231, %v2282
        %v2297 = vmul.f32 %v2234, %v2282
        %v2298 = vmul.f32 %v2239, %v2282
        %v2299 = vmul.f32 %v2242, %v2282
        %v2300 = vmul.f32 %v2247, %v2282
        %v2301 = vmul.f32 %v2250, %v2282
        %v2302 = vmul.f32 %v2255, %v2282
        %v2303 = vmul.f32 %v2258, %v2282
        %v2304 = vmul.f32 %v2263, %v2282
        %v2305 = vmul.f32 %v2266, %v2282
        %v2306 = vmul.f32 %v2271, %v2282
        %v2307 = vmul.f32 %v2274, %v2282
        %v2308 = vld [vmem:[%s8] sm:$0x1]
        %v2310 = vlaneseq
        %v2311 = vshrl.u32 %v2310, 7
        %v2312 = vsub.s32 0, %v2311
        %v2313 = vrot.slane %v2308, %v2312
        %v2315 = vadd.f32 %v2284, %v2313
        %v2316 = vadd.f32 %v2285, %v2313
        %v2317 = vadd.f32 %v2286, %v2313
        %v2318 = vadd.f32 %v2287, %v2313
        %v2319 = vadd.f32 %v2288, %v2313
        %v2320 = vadd.f32 %v2289, %v2313
        %v2321 = vadd.f32 %v2290, %v2313
        %v2322 = vadd.f32 %v2291, %v2313
        %v2323 = vadd.f32 %v2292, %v2313
        %v2324 = vadd.f32 %v2293, %v2313
        %v2325 = vadd.f32 %v2294, %v2313
        %v2326 = vadd.f32 %v2295, %v2313
        %v2327 = vadd.f32 %v2296, %v2313
        %v2328 = vadd.f32 %v2297, %v2313
        %v2329 = vadd.f32 %v2298, %v2313
        %v2330 = vadd.f32 %v2299, %v2313
        %v2331 = vadd.f32 %v2300, %v2313
        %v2332 = vadd.f32 %v2301, %v2313
        %v2333 = vadd.f32 %v2302, %v2313
        %v2334 = vadd.f32 %v2303, %v2313
        %v2335 = vadd.f32 %v2304, %v2313
        %v2336 = vadd.f32 %v2305, %v2313
        %v2337 = vadd.f32 %v2306, %v2313
        %v2338 = vadd.f32 %v2307, %v2313
        %v2339 = vadd.f32 %v2315, %v338
        %v2340 = vadd.f32 %v2316, %v339
        %v2341 = vadd.f32 %v2317, %v340
        %v2342 = vadd.f32 %v2318, %v341
        %v2343 = vadd.f32 %v2319, %v342
        %v2344 = vadd.f32 %v2320, %v343
        %v2345 = vadd.f32 %v2321, %v344
        %v2346 = vadd.f32 %v2322, %v345
        %v2347 = vadd.f32 %v2323, %v346
        %v2348 = vadd.f32 %v2324, %v347
        %v2349 = vadd.f32 %v2325, %v348
        %v2350 = vadd.f32 %v2326, %v349
        %v2351 = vadd.f32 %v2327, %v350
        %v2352 = vadd.f32 %v2328, %v351
        %v2353 = vadd.f32 %v2329, %v352
        %v2354 = vadd.f32 %v2330, %v353
        %v2355 = vadd.f32 %v2331, %v354
        %v2356 = vadd.f32 %v2332, %v355
        %v2357 = vadd.f32 %v2333, %v356
        %v2358 = vadd.f32 %v2334, %v357
        %v2359 = vadd.f32 %v2335, %v358
        %v2360 = vadd.f32 %v2336, %v359
        %v2361 = vadd.f32 %v2337, %v360
        %v2362 = vadd.f32 %v2338, %v361
        %v2363 = vmul.f32 %v2339, 0.5
        %v2364 = vmul.f32 %v2340, 0.5
        %v2365 = vmul.f32 %v2341, 0.5
        %v2366 = vmul.f32 %v2342, 0.5
        %v2367 = vmul.f32 %v2343, 0.5
        %v2368 = vmul.f32 %v2344, 0.5
        %v2369 = vmul.f32 %v2345, 0.5
        %v2370 = vmul.f32 %v2346, 0.5
        %v2371 = vmul.f32 %v2347, 0.5
        %v2372 = vmul.f32 %v2348, 0.5
        %v2373 = vmul.f32 %v2349, 0.5
        %v2374 = vmul.f32 %v2350, 0.5
        %v2375 = vmul.f32 %v2351, 0.5
        %v2376 = vmul.f32 %v2352, 0.5
        %v2377 = vmul.f32 %v2353, 0.5
        %v2378 = vmul.f32 %v2354, 0.5
        %v2379 = vmul.f32 %v2355, 0.5
        %v2380 = vmul.f32 %v2356, 0.5
        %v2381 = vmul.f32 %v2357, 0.5
        %v2382 = vmul.f32 %v2358, 0.5
        %v2383 = vmul.f32 %v2359, 0.5
        %v2384 = vmul.f32 %v2360, 0.5
        %v2385 = vmul.f32 %v2361, 0.5
        %v2386 = vmul.f32 %v2362, 0.5
        %v2387 = vmul.f32 %v2339, 0.70710677
        %v2388 = vmul.f32 %v2340, 0.70710677
        %v2389 = vmul.f32 %v2341, 0.70710677
        %v2390 = vmul.f32 %v2342, 0.70710677
        %v2391 = vmul.f32 %v2343, 0.70710677
        %v2392 = vmul.f32 %v2344, 0.70710677
        %v2393 = vmul.f32 %v2345, 0.70710677
        %v2394 = vmul.f32 %v2346, 0.70710677
        %v2395 = vmul.f32 %v2347, 0.70710677
        %v2396 = vmul.f32 %v2348, 0.70710677
        %v2397 = vmul.f32 %v2349, 0.70710677
        %v2398 = vmul.f32 %v2350, 0.70710677
        %v2399 = vmul.f32 %v2351, 0.70710677
        %v2400 = vmul.f32 %v2352, 0.70710677
        %v2401 = vmul.f32 %v2353, 0.70710677
        %v2402 = vmul.f32 %v2354, 0.70710677
        %v2403 = vmul.f32 %v2355, 0.70710677
        %v2404 = vmul.f32 %v2356, 0.70710677
        %v2405 = vmul.f32 %v2357, 0.70710677
        %v2406 = vmul.f32 %v2358, 0.70710677
        %v2407 = vmul.f32 %v2359, 0.70710677
        %v2408 = vmul.f32 %v2360, 0.70710677
        %v2409 = vmul.f32 %v2361, 0.70710677
        %v2410 = vmul.f32 %v2362, 0.70710677
        %v2411 = verf.f32.pop %v2387
        %v2412 = verf.f32.pop %v2388
        %v2413 = verf.f32.pop %v2389
        %v2414 = verf.f32.pop %v2390
        %v2415 = verf.f32.pop %v2391
        %v2416 = verf.f32.pop %v2392
        %v2417 = verf.f32.pop %v2393
        %v2418 = verf.f32.pop %v2394
        %v2419 = verf.f32.pop %v2395
        %v2420 = verf.f32.pop %v2396
        %v2421 = verf.f32.pop %v2397
        %v2422 = verf.f32.pop %v2398
        %v2423 = verf.f32.pop %v2399
        %v2424 = verf.f32.pop %v2400
        %v2425 = verf.f32.pop %v2401
        %v2426 = verf.f32.pop %v2402
        %v2427 = verf.f32.pop %v2403
        %v2428 = verf.f32.pop %v2404
        %v2429 = verf.f32.pop %v2405
        %v2430 = verf.f32.pop %v2406
        %v2431 = verf.f32.pop %v2407
        %v2432 = verf.f32.pop %v2408
        %v2433 = verf.f32.pop %v2409
        %v2434 = verf.f32.pop %v2410
        %v2435 = vadd.f32 %v2411, 1.0
        %v2436 = vadd.f32 %v2412, 1.0
        %v2437 = vadd.f32 %v2413, 1.0
        %v2438 = vadd.f32 %v2414, 1.0
        %v2439 = vadd.f32 %v2415, 1.0
        %v2440 = vadd.f32 %v2416, 1.0
        %v2441 = vadd.f32 %v2417, 1.0
        %v2442 = vadd.f32 %v2418, 1.0
        %v2443 = vadd.f32 %v2419, 1.0
        %v2444 = vadd.f32 %v2420, 1.0
        %v2445 = vadd.f32 %v2421, 1.0
        %v2446 = vadd.f32 %v2422, 1.0
        %v2447 = vadd.f32 %v2423, 1.0
        %v2448 = vadd.f32 %v2424, 1.0
        %v2449 = vadd.f32 %v2425, 1.0
        %v2450 = vadd.f32 %v2426, 1.0
        %v2451 = vadd.f32 %v2427, 1.0
        %v2452 = vadd.f32 %v2428, 1.0
        %v2453 = vadd.f32 %v2429, 1.0
        %v2454 = vadd.f32 %v2430, 1.0
        %v2455 = vadd.f32 %v2431, 1.0
        %v2456 = vadd.f32 %v2432, 1.0
        %v2457 = vadd.f32 %v2433, 1.0
        %v2458 = vadd.f32 %v2434, 1.0
        %v2459 = vmul.f32 %v2363, %v2435
        %v2460 = vmul.f32 %v2364, %v2436
        %v2461 = vmul.f32 %v2365, %v2437
        %v2462 = vmul.f32 %v2366, %v2438
        %v2463 = vmul.f32 %v2367, %v2439
        %v2464 = vmul.f32 %v2368, %v2440
        %v2465 = vmul.f32 %v2369, %v2441
        %v2466 = vmul.f32 %v2370, %v2442
        %v2467 = vmul.f32 %v2371, %v2443
        %v2468 = vmul.f32 %v2372, %v2444
        %v2469 = vmul.f32 %v2373, %v2445
        %v2470 = vmul.f32 %v2374, %v2446
        %v2471 = vmul.f32 %v2375, %v2447
        %v2472 = vmul.f32 %v2376, %v2448
        %v2473 = vmul.f32 %v2377, %v2449
        %v2474 = vmul.f32 %v2378, %v2450
        %v2475 = vmul.f32 %v2379, %v2451
        %v2476 = vmul.f32 %v2380, %v2452
        %v2477 = vmul.f32 %v2381, %v2453
        %v2478 = vmul.f32 %v2382, %v2454
        %v2479 = vmul.f32 %v2383, %v2455
        %v2480 = vmul.f32 %v2384, %v2456
        %v2481 = vmul.f32 %v2385, %v2457
        %v2482 = vmul.f32 %v2386, %v2458
        %2483 = vst [vmem:[%s328] sm:$0xff] %v2459
        %2484 = vst [vmem:[%s328 + $0x8] sm:$0xff] %v2460
        %2485 = vst [vmem:[%s328 + $0x10] sm:$0xff] %v2461
        %2486 = vst [vmem:[%s328 + $0x18] sm:$0xff] %v2462
        %2487 = vst [vmem:[%s328 + $0x20] sm:$0xff] %v2463
        %2488 = vst [vmem:[%s328 + $0x28] sm:$0xff] %v2464
        %2489 = vst [vmem:[%s328 + $0x30] sm:$0xff] %v2465
        %2490 = vst [vmem:[%s328 + $0x38] sm:$0xff] %v2466
        %2491 = vst [vmem:[%s328 + $0x40] sm:$0xff] %v2467
        %2492 = vst [vmem:[%s328 + $0x48] sm:$0xff] %v2468
        %2493 = vst [vmem:[%s328 + $0x50] sm:$0xff] %v2469
        %2494 = vst [vmem:[%s328 + $0x58] sm:$0xff] %v2470
        %2495 = vst [vmem:[%s328 + $0x60] sm:$0xff] %v2471
        %2496 = vst [vmem:[%s328 + $0x68] sm:$0xff] %v2472
        %2497 = vst [vmem:[%s328 + $0x70] sm:$0xff] %v2473
        %2498 = vst [vmem:[%s328 + $0x78] sm:$0xff] %v2474
        %2499 = vst [vmem:[%s328 + $0x80] sm:$0xff] %v2475
        %2500 = vst [vmem:[%s328 + $0x88] sm:$0xff] %v2476
        %2501 = vst [vmem:[%s328 + $0x90] sm:$0xff] %v2477
        %2502 = vst [vmem:[%s328 + $0x98] sm:$0xff] %v2478
        %2503 = vst [vmem:[%s328 + $0xa0] sm:$0xff] %v2479
        %2504 = vst [vmem:[%s328 + $0xa8] sm:$0xff] %v2480
        %2505 = vst [vmem:[%s328 + $0xb0] sm:$0xff] %v2481
        %2506 = vst [vmem:[%s328 + $0xb8] sm:$0xff] %v2482
        %s2507 = sand.u32 %s225, 1
        %s2508 = scalar_lea.sflag [#allocation3], %s2507
        %s2509 = sand.u32 %s225, 1
        %s2510 = smul.addr %s2509, 192
        %s2511 = scalar_lea.vmem [#allocation2], %s2510
        // Predicated region
        $region57: #{temporal_conv_block.1} parent=55 // pred_check
          %p2512 = pneg %p235
        $region58: #{temporal_conv_block.1} parent=55 // pred_check_branch
          %2514 = sbr.rel (%p2512) target = $region60
        $region59: #{temporal_conv_block.1} parent=55 // pred_region
          %s2515 = smul.u32 8, %s23
          %s2517 = ssub.s32 3072, 3072
          %2518 = vsyncadd %s2508, %s2517
          %s2519 = smul.addr %s2515, 3
          %s2520 = smul.addr %s2519, 128
          %s2521 = scalar_lea.hbm %s9, %s2520
          %s2522 = sshll.u32 %s2511, 4
          %s2523 = int_to_ptr.vmem [resolvable:$true] %s2522
          %2528 = dma.vmem_to_hbm [thread:$0]  %s2523, 3072, %s2521, %s2508, 128, 128, 8
        $region60: #{temporal_conv_block.1} parent=55 // pred_fallthru
          _
      $region56: #{temporal_conv_block.1} parent=5 // pred_fallthru
        _
      %p2529 = scmp.le.s32.totalorder 2, %s18
      // Predicated region
      $region61: #{temporal_conv_block.1} parent=5 // pred_check
        %p2530 = pneg %p2529
      $region62: #{temporal_conv_block.1} parent=5 // pred_check_branch
        %2532 = sbr.rel (%p2530) target = $region64
      $region63: #{temporal_conv_block.1} parent=5 // pred_region
        %s2533 = ssub.s32 %s18, 2
        // Predicated region
        $region65: #{temporal_conv_block.1} parent=63 // pred_check
          %p2534 = pneg %p241
        $region66: #{temporal_conv_block.1} parent=63 // pred_check_branch
          %2536 = sbr.rel (%p2534) target = $region68
        $region67: #{temporal_conv_block.1} parent=63 // pred_region
          %s2537 = sand.u32 %s226, 1
          %s2538 = scalar_lea.sflag [#allocation3], %s2537
          %s2539 = sand.u32 %s226, 1
          %s2540 = smul.addr %s2539, 192
          %s2541 = scalar_lea.vmem [#allocation2], %s2540
          %2542 = dma.done %s2538, 3072
        $region68: #{temporal_conv_block.1} parent=63 // pred_fallthru
          _
      $region64: #{temporal_conv_block.1} parent=5 // pred_fallthru
        _
    $region6: #{temporal_conv_block.1} parent=1 // loop_footer
      %s22 = sadd.s32 1, %s18
    $region7: #{temporal_conv_block.1} parent=1 // loop_footer_branch
      %17 = sbr.rel target = $region3
    $region8: #{temporal_conv_block.1} parent=1 // loop_exit
      _
    %2543 = vsyncpa [#allocation3], 1
    %s2544 = scalar_lea.sflag [#allocation3], 1
    %2545 = vsyncpa %s2544, 1

</llo_original>
